<compile_context>
chip_gen: v5e
topology: v5e:2x2
jax: 0.10.0
libtpu: 0.0.40
codegen_flags: <defaults>
</compile_context>

<pallas_src>
import math

import numpy as np
import jax
import jax.numpy as jnp
from jax import lax
from jax.experimental import pallas as pl
from jax.experimental.pallas import tpu as pltpu

OUT_RAW = 8      # true post-projection width (2 * 4)
OUT_PAD = 128    # lane-dense padded output width (sliced to OUT_RAW outside the kernel)


def _round_up(x, m):
    return ((x + m - 1) // m) * m


# --------------------------- fused Pallas kernel -----------------------------

def _make_fused_kernel(r, Bc, Tm_pad, Tr, F, V, H):
    """One grid step = one chunk of Bc batch elements, folded into the M rows."""
    M = Bc * Tm_pad          # mora rows in the chunk slab
    N = Bc * Tr              # pooled-frame rows in the chunk slab
    F1 = F + 1               # features + ones column (counts)

    def kernel(lens_ref,                       # SMEM (B_pad, 2) int32: [mora_len, frame_len // r]
               vowel_ref,                      # (M, 1)      int32
               idx_ref,                        # (r, N)      int32  grouped mora index (-1 = pad), chunk-row offset applied
               feat_ref,                       # (r, N, F1)  bf16   grouped frame features, last col = 1
               embw_ref,                       # (V, H)  bf16   vowel-embedding @ pre_mora vowel half (folded)
               pmwf_ref, pmb_ref,              # (F, H)  bf16,  (1, H) f32
               pfw_ref, pfb_ref,               # (F1, H) bf16 (zero last row), (1, H) f32
               wa_ref,                         # (H, H)  bf16   Wq @ Wk^T / sqrt(H) (folded)
               wv_ref, wo_ref,                 # (H, H)  bf16,  (H, H) bf16
               postw_ref, postb_ref,           # (H, OUT_PAD) bf16, (1, OUT_PAD) f32
               o_ref):                         # (M, OUT_PAD) f32
        g = pl.program_id(0)

        # ---- scatter-mean over moras + pre_frame linear + time max-pool, fused over r groups ----
        mora_rows = lax.broadcasted_iota(jnp.int32, (M, N), 0)
        idx_all = idx_ref[...]                                   # (r, N)
        pfw = pfw_ref[...]                                       # (F1, H), last row zero
        sums = jnp.zeros((M, F1), jnp.float32)
        pooled = None
        for j in range(r):                                       # static tiny loop (= reduction factor)
            fj = feat_ref[j, :, :]                               # (N, F1) bf16, last col = 1
            onehot = (mora_rows == idx_all[j:j + 1, :]).astype(jnp.bfloat16)      # (M, N)
            sums = sums + jnp.dot(onehot, fj, preferred_element_type=jnp.float32)  # feature sums + counts
            fh_j = jnp.dot(fj, pfw, preferred_element_type=jnp.float32)            # (N, H)
            pooled = fh_j if pooled is None else jnp.maximum(pooled, fh_j)
        pooled = pooled + pfb_ref[...]                           # (N, H)
        counts = sums[:, F:F1]                                   # (M, 1) via the ones column
        # exact divide; matches torch scatter_reduce(mean, include_self=False): untouched rows stay 0
        mora_feat = sums[:, :F] / jnp.maximum(counts, 1.0)       # (M, F)

        # ---- vowel embedding + pre_mora (embedding folded into a (V, H) table) ----
        v_onehot = (lax.broadcasted_iota(jnp.int32, (M, V), 1)
                    == vowel_ref[...]).astype(jnp.bfloat16)      # (M, V)
        mh = (jnp.dot(v_onehot, embw_ref[...], preferred_element_type=jnp.float32)
              + jnp.dot(mora_feat.astype(jnp.bfloat16), pmwf_ref[...],
                        preferred_element_type=jnp.float32)
              + pmb_ref[...])                                    # (M, H)

        # ---- masked cross attention: queries = moras, keys/values = pooled frames ----
        qa = jnp.dot(mh.astype(jnp.bfloat16), wa_ref[...],
                     preferred_element_type=jnp.float32)         # (M, H): mh @ (Wq Wk^T / sqrt(H))
        s = lax.dot_general(qa.astype(jnp.bfloat16), pooled.astype(jnp.bfloat16),
                            dimension_numbers=(((1,), (1,)), ((), ())),
                            preferred_element_type=jnp.float32)  # (M, N), no XLU transpose

        # block-diagonal mask across the Bc elements of this chunk (static tiny loop)
        row_idx = lax.broadcasted_iota(jnp.int32, (M, 1), 0)
        col_idx = lax.broadcasted_iota(jnp.int32, (1, N), 1)
        valid = None       # (M, N) key-valid & same-element mask
        row_valid = None   # (M, 1) query rows within mora_len
        for c in range(Bc):
            b = g * Bc + c
            mlen = lens_ref[b, 0]
            glen = lens_ref[b, 1]                                # floor(frame_len / r), host-precomputed
            in_rows = (row_idx >= c * Tm_pad) & (row_idx < (c + 1) * Tm_pad)
            in_cols = (col_idx >= c * Tr) & (col_idx < c * Tr + glen)
            vc = in_rows & in_cols
            rc = (row_idx >= c * Tm_pad) & (row_idx < c * Tm_pad + mlen)
            valid = vc if valid is None else (valid | vc)
            row_valid = rc if row_valid is None else (row_valid | rc)

        s = jnp.where(valid, s, -1e9)
        s = s - jnp.max(s, axis=-1, keepdims=True)
        p = jnp.exp(s) * valid.astype(jnp.float32)               # exact zeros outside the mask
        p = p / jnp.maximum(jnp.sum(p, axis=-1, keepdims=True), 1e-30)   # rows with no keys -> ctx = 0
        v = jnp.dot(pooled.astype(jnp.bfloat16), wv_ref[...],
                    preferred_element_type=jnp.float32)          # (N, H)
        ctx = jnp.dot(p.astype(jnp.bfloat16), v.astype(jnp.bfloat16),
                      preferred_element_type=jnp.float32)        # (M, H)
        attn = mh + jnp.dot(ctx.astype(jnp.bfloat16), wo_ref[...],
                            preferred_element_type=jnp.float32)  # residual
        attn = jnp.where(row_valid, attn, 0.0)

        # ---- post projection, lane-dense (padded to OUT_PAD; sliced in the wrapper) ----
        out = jnp.dot(attn.astype(jnp.bfloat16), postw_ref[...],
                      preferred_element_type=jnp.float32) + postb_ref[...]
        o_ref[...] = out.astype(o_ref.dtype)

    return kernel


def fused_predictor_call(lens, vowel_g, idx_g, feat_g, params):
    (embw, pmwf, pmb, pfw, pfb, wa, wv, wo, postw, postb) = params
    G, M, _ = vowel_g.shape
    _, r, N, F1 = feat_g.shape
    B_pad = lens.shape[0]
    Bc = B_pad // G
    Tm_pad = M // Bc
    Tr = N // Bc
    F = F1 - 1
    V, H = embw.shape
    kernel = _make_fused_kernel(r, Bc, Tm_pad, Tr, F, V, H)
    grid_spec = pltpu.PrefetchScalarGridSpec(
        num_scalar_prefetch=1,                       # lengths land in SMEM; masks built in-kernel
        grid=(G,),
        in_specs=[
            pl.BlockSpec((None, M, 1), lambda g, lens: (g, 0, 0)),
            pl.BlockSpec((None, r, N), lambda g, lens: (g, 0, 0)),
            pl.BlockSpec((None, r, N, F1), lambda g, lens: (g, 0, 0, 0)),
            pl.BlockSpec((V, H), lambda g, lens: (0, 0)),
            pl.BlockSpec((F, H), lambda g, lens: (0, 0)),
            pl.BlockSpec((1, H), lambda g, lens: (0, 0)),
            pl.BlockSpec((F1, H), lambda g, lens: (0, 0)),
            pl.BlockSpec((1, H), lambda g, lens: (0, 0)),
            pl.BlockSpec((H, H), lambda g, lens: (0, 0)),
            pl.BlockSpec((H, H), lambda g, lens: (0, 0)),
            pl.BlockSpec((H, H), lambda g, lens: (0, 0)),
            pl.BlockSpec((H, OUT_PAD), lambda g, lens: (0, 0)),
            pl.BlockSpec((1, OUT_PAD), lambda g, lens: (0, 0)),
        ],
        out_specs=pl.BlockSpec((None, M, OUT_PAD), lambda g, lens: (g, 0, 0)),
    )
    return pl.pallas_call(
        kernel,
        out_shape=jax.ShapeDtypeStruct((G, M, OUT_PAD), jnp.float32),
        grid_spec=grid_spec,
        # 2 "parallel" steps -> both v7x TensorCores busy; VMEM limit left at default
        # (per-step working set is << 1 MiB, the kernel is overhead-bound, not VMEM-bound).
        compiler_params=pltpu.CompilerParams(dimension_semantics=("parallel",)),
    )(lens, vowel_g, idx_g, feat_g, embw, pmwf, pmb, pfw, pfb, wa, wv, wo, postw, postb)


# ------------------------------ Predictor ------------------------------------

class Predictor:
    def __init__(self, vowel_size, vowel_embedding_size, frame_reduction_factor,
                 feature_size, hidden_size, key):
        self.frame_reduction_factor = frame_reduction_factor
        H = hidden_size
        E = vowel_embedding_size
        Fs = feature_size
        ks = jax.random.split(key, 10)
        s = 0.02
        # weights stored bf16 (MXU-native), biases f32 (added after f32 accumulation)
        emb = s * jax.random.normal(ks[0], (vowel_size, E), jnp.float32)
        pm_wv = s * jax.random.normal(ks[1], (E, H), jnp.float32)
        pm_wf = s * jax.random.normal(ks[2], (Fs, H), jnp.float32)
        # embedding lookup + pre_mora vowel half folded into one (V, H) table (algebraic, exact in f32)
        self.embw = (emb @ pm_wv).astype(jnp.bfloat16)
        self.pmwf = pm_wf.astype(jnp.bfloat16)
        self.pmb = s * jax.random.normal(ks[3], (1, H), jnp.float32)
        pfw = s * jax.random.normal(ks[4], (Fs, H), jnp.float32)
        # zero row appended so the ones (count) column of the features contributes nothing to pre_frame
        self.pfw = jnp.concatenate([pfw, jnp.zeros((1, H), jnp.float32)], axis=0).astype(jnp.bfloat16)
        self.pfb = s * jax.random.normal(ks[5], (1, H), jnp.float32)
        # TODO(synk): MMEncoder definition is not provided in the reference; stand-in is a single
        # masked cross-attention block (x_a attends to x_b) with residual connection.
        # Wq @ Wk^T / sqrt(H) is pre-folded into one (H, H) score matrix (removes the K projection).
        wq = s * jax.random.normal(ks[6], (H, H), jnp.float32)
        wk = s * jax.random.normal(ks[7], (H, H), jnp.float32)
        self.wa = ((wq @ wk.T) / math.sqrt(H)).astype(jnp.bfloat16)
        self.wv = (s * jax.random.normal(ks[8], (H, H), jnp.float32)).astype(jnp.bfloat16)
        self.wo = (s * jax.random.normal(ks[9], (H, H), jnp.float32)).astype(jnp.bfloat16)
        post_w = s * jax.random.normal(jax.random.fold_in(key, 123), (H, OUT_RAW), jnp.float32)
        # zero-pad the post projection to 128 lanes -> unmasked lane-dense stores in-kernel
        self.postw = jnp.zeros((H, OUT_PAD), jnp.bfloat16).at[:, :OUT_RAW].set(post_w.astype(jnp.bfloat16))
        self.postb = jnp.zeros((1, OUT_PAD), jnp.float32)
        self._jit_call = jax.jit(fused_predictor_call)

    def _params(self):
        return (self.embw, self.pmwf, self.pmb, self.pfw, self.pfb,
                self.wa, self.wv, self.wo, self.postw, self.postb)

    def forward(self, vowel_list, feature_list, mora_index_list):
        B = len(vowel_list)
        r = self.frame_reduction_factor
        mora_lengths = [int(v.shape[0]) for v in vowel_list]
        frame_lengths = [int(f.shape[0]) for f in feature_list]
        F = int(feature_list[0].shape[-1])

        G = 2 if B >= 2 else 1                  # >= 2 grid steps keep both v7x TensorCores busy
        Bc = -(-B // G)                         # batch elements folded per grid step
        B_pad = G * Bc

        # bucket padded lengths (multiples of 8 / 8*r): full-sublane stores + no per-length recompiles
        Tm_pad = _round_up(max(max(mora_lengths), 1), 8)
        Tf_pad = _round_up(max(max(frame_lengths), 1), 8 * r)
        Tr = Tf_pad // r
        M = Bc * Tm_pad
        N = Bc * Tr
        F1 = F + 1

        # host-side packing (pad_sequence + r-grouping + batch folding).
        # TODO(synk): at production batch sizes this numpy packing + H2D should be pre-staged / pinned
        # per bucket off the critical path; kept inline here for a self-contained script.
        vowel_g = np.zeros((G, M, 1), np.int32)
        idx_g = np.full((G, r, N), -1, np.int32)
        feat_g = np.zeros((G, r, N, F1), np.float32)
        feat_g[..., F] = 1.0                    # ones column -> per-mora counts via the onehot matmul
        lens = np.zeros((B_pad, 2), np.int32)
        for b in range(B):
            g, c = divmod(b, Bc)
            ml, fl = mora_lengths[b], frame_lengths[b]
            lens[b, 0] = ml
            lens[b, 1] = fl // r                # grouped key length; floor == torch max_pool1d / mask semantics
            vowel_g[g, c * Tm_pad:c * Tm_pad + ml, 0] = np.asarray(vowel_list[b], np.int32)
            fpad = np.zeros((Tf_pad, F), np.float32)
            fpad[:fl] = np.asarray(feature_list[b], np.float32)
            feat_g[g, :, c * Tr:(c + 1) * Tr, :F] = fpad.reshape(Tr, r, F).transpose(1, 0, 2)
            ipad = np.full((Tf_pad,), -1, np.int64)
            ipad[:fl] = np.asarray(mora_index_list[b], np.int64) + c * Tm_pad   # offset into the chunk slab
            idx_g[g, :, c * Tr:(c + 1) * Tr] = ipad.reshape(Tr, r).transpose(1, 0)
        feat_bf16 = feat_g.astype(jnp.bfloat16)  # host-side bf16 cast: halves HBM->VMEM DMA

        out_pad = self._jit_call(jnp.asarray(lens), jnp.asarray(vowel_g),
                                 jnp.asarray(idx_g), jnp.asarray(feat_bf16),
                                 self._params())                               # (G, M, OUT_PAD)
        results = []
        for b in range(B):
            g, c = divmod(b, Bc)
            l = mora_lengths[b]
            results.append(out_pad[g, c * Tm_pad:c * Tm_pad + l, :OUT_RAW].reshape(l, 2, 4))
        return results


# --------------------------------- main ---------------------------------------

if __name__ == "__main__":
    key = jax.random.PRNGKey(0)
    B = 2
    vowel_size = 10
    vowel_embedding_size = 8
    feature_size = 8
    hidden_size = 32
    frame_reduction_factor = 2
    mora_lengths = [6, 4]
    frame_lengths = [16, 12]

    k_model, k_data = jax.random.split(key)
    model = Predictor(vowel_size, vowel_embedding_size, frame_reduction_factor,
                      feature_size, hidden_size, k_model)

    dks = jax.random.split(k_data, 2 * B)
    vowel_list = [
        jax.random.randint(dks[i], (mora_lengths[i],), 0, vowel_size, dtype=jnp.int32)
        for i in range(B)
    ]
    feature_list = [
        jax.random.normal(dks[B + i], (frame_lengths[i], feature_size), jnp.float32)
        for i in range(B)
    ]
    mora_index_list = []
    for i in range(B):
        idx = (jnp.arange(frame_lengths[i]) * mora_lengths[i]) // frame_lengths[i]
        mora_index_list.append(jnp.minimum(idx, mora_lengths[i] - 1).astype(jnp.int32))

    outputs = model.forward(vowel_list, feature_list, mora_index_list)
    outputs = jax.block_until_ready(outputs)
    assert outputs[0].shape == (mora_lengths[0], 2, 4)
    assert outputs[1].shape == (mora_lengths[1], 2, 4)
    assert all(bool(jnp.isfinite(o).all()) for o in outputs)
    print("KERNEL_OK")
</pallas_src>

<mosaic_0001>
module attributes {stable_mosaic.version = 11 : i64} {
  func.func @kernel(%arg0: i32, %arg1: memref<2x2xi32, #tpu.memory_space<smem>>, %arg2: memref<1x8x1xi32, #tpu.memory_space<vmem>>, %arg3: memref<1x2x8xi32, #tpu.memory_space<vmem>>, %arg4: memref<1x2x8x9xbf16, #tpu.memory_space<vmem>>, %arg5: memref<10x32xbf16, #tpu.memory_space<vmem>>, %arg6: memref<8x32xbf16, #tpu.memory_space<vmem>>, %arg7: memref<1x32xf32, #tpu.memory_space<vmem>>, %arg8: memref<9x32xbf16, #tpu.memory_space<vmem>>, %arg9: memref<1x32xf32, #tpu.memory_space<vmem>>, %arg10: memref<32x32xbf16, #tpu.memory_space<vmem>>, %arg11: memref<32x32xbf16, #tpu.memory_space<vmem>>, %arg12: memref<32x32xbf16, #tpu.memory_space<vmem>>, %arg13: memref<32x128xbf16, #tpu.memory_space<vmem>>, %arg14: memref<1x128xf32, #tpu.memory_space<vmem>>, %arg15: memref<1x8x128xf32, #tpu.memory_space<vmem>>) attributes {dimension_semantics = [#tpu.dimension_semantics<parallel>], iteration_bounds = array<i64: 2>, scalar_prefetch = 1 : i64, scratch_operands = 0 : i64, tpu.core_type = #tpu.core_type<tc>, window_params = [{transform_indices = @transform_0, window_bounds = array<i64: 1, 8, 1>}, {transform_indices = @transform_1, window_bounds = array<i64: 1, 2, 8>}, {transform_indices = @transform_2, window_bounds = array<i64: 1, 2, 8, 9>}, {pipeline_mode = #tpu.pipeline_mode<synchronous>, transform_indices = @transform_3, window_bounds = array<i64: 10, 32>}, {pipeline_mode = #tpu.pipeline_mode<synchronous>, transform_indices = @transform_4, window_bounds = array<i64: 8, 32>}, {pipeline_mode = #tpu.pipeline_mode<synchronous>, transform_indices = @transform_5, window_bounds = array<i64: 1, 32>}, {pipeline_mode = #tpu.pipeline_mode<synchronous>, transform_indices = @transform_6, window_bounds = array<i64: 9, 32>}, {pipeline_mode = #tpu.pipeline_mode<synchronous>, transform_indices = @transform_7, window_bounds = array<i64: 1, 32>}, {pipeline_mode = #tpu.pipeline_mode<synchronous>, transform_indices = @transform_8, window_bounds = array<i64: 32, 32>}, {pipeline_mode = #tpu.pipeline_mode<synchronous>, transform_indices = @transform_9, window_bounds = array<i64: 32, 32>}, {pipeline_mode = #tpu.pipeline_mode<synchronous>, transform_indices = @transform_10, window_bounds = array<i64: 32, 32>}, {pipeline_mode = #tpu.pipeline_mode<synchronous>, transform_indices = @transform_11, window_bounds = array<i64: 32, 128>}, {pipeline_mode = #tpu.pipeline_mode<synchronous>, transform_indices = @transform_12, window_bounds = array<i64: 1, 128>}, {transform_indices = @transform_13, window_bounds = array<i64: 1, 8, 128>}]} {
    %0 = tpu.iota {dimensions = array<i32: 0>} : vector<8x8xi32>
    %c0 = arith.constant 0 : index
    %c0_0 = arith.constant 0 : index
    %c0_1 = arith.constant 0 : index
    %1 = vector.load %arg3[%c0, %c0_0, %c0_1] : memref<1x2x8xi32, #tpu.memory_space<vmem>>, vector<1x2x8xi32>
    %2 = vector.shape_cast %1 : vector<1x2x8xi32> to vector<2x8xi32>
    %c0_2 = arith.constant 0 : index
    %c0_3 = arith.constant 0 : index
    %3 = vector.load %arg8[%c0_2, %c0_3] : memref<9x32xbf16, #tpu.memory_space<vmem>>, vector<9x32xbf16>
    %cst = arith.constant 0.000000e+00 : f32
    %4 = vector.broadcast %cst : f32 to vector<8x9xf32>
    %c0_4 = arith.constant 0 : index
    %c0_5 = arith.constant 0 : index
    %c0_6 = arith.constant 0 : index
    %c0_7 = arith.constant 0 : index
    %5 = vector.load %arg4[%c0_4, %c0_5, %c0_6, %c0_7] : memref<1x2x8x9xbf16, #tpu.memory_space<vmem>>, vector<1x1x8x9xbf16>
    %6 = vector.shape_cast %5 : vector<1x1x8x9xbf16> to vector<8x9xbf16>
    %7 = vector.extract_strided_slice %2 {offsets = [0, 0], sizes = [1, 8], strides = [1, 1]} : vector<2x8xi32> to vector<1x8xi32>
    %8 = vector.broadcast %7 : vector<1x8xi32> to vector<8x8xi32>
    %9 = arith.cmpi eq, %0, %8 : vector<8x8xi32>
    %10 = arith.extui %9 : vector<8x8xi1> to vector<8x8xi32>
    %11 = arith.sitofp %10 : vector<8x8xi32> to vector<8x8xf32>
    %12 = arith.truncf %11 : vector<8x8xf32> to vector<8x8xbf16>
    %cst_8 = arith.constant dense<0.000000e+00> : vector<8x9xf32>
    %13 = tpu.matmul %12, %6, %cst_8 {dimension_numbers = #tpu.dot_dimension_numbers<[1], [0], [0], [1], [0, 0, 1, 1], [], []>} : vector<8x8xbf16>, vector<8x9xbf16>, vector<8x9xf32> -> vector<8x9xf32>
    %14 = arith.addf %4, %13 : vector<8x9xf32>
    %cst_9 = arith.constant dense<0.000000e+00> : vector<8x32xf32>
    %15 = tpu.matmul %6, %3, %cst_9 {dimension_numbers = #tpu.dot_dimension_numbers<[1], [0], [0], [1], [0, 0, 1, 1], [], []>} : vector<8x9xbf16>, vector<9x32xbf16>, vector<8x32xf32> -> vector<8x32xf32>
    %c0_10 = arith.constant 0 : index
    %c1 = arith.constant 1 : index
    %c0_11 = arith.constant 0 : index
    %c0_12 = arith.constant 0 : index
    %16 = vector.load %arg4[%c0_10, %c1, %c0_11, %c0_12] : memref<1x2x8x9xbf16, #tpu.memory_space<vmem>>, vector<1x1x8x9xbf16>
    %17 = vector.shape_cast %16 : vector<1x1x8x9xbf16> to vector<8x9xbf16>
    %18 = vector.extract_strided_slice %2 {offsets = [1, 0], sizes = [1, 8], strides = [1, 1]} : vector<2x8xi32> to vector<1x8xi32>
    %19 = vector.broadcast %18 : vector<1x8xi32> to vector<8x8xi32>
    %20 = arith.cmpi eq, %0, %19 : vector<8x8xi32>
    %21 = arith.extui %20 : vector<8x8xi1> to vector<8x8xi32>
    %22 = arith.sitofp %21 : vector<8x8xi32> to vector<8x8xf32>
    %23 = arith.truncf %22 : vector<8x8xf32> to vector<8x8xbf16>
    %cst_13 = arith.constant dense<0.000000e+00> : vector<8x9xf32>
    %24 = tpu.matmul %23, %17, %cst_13 {dimension_numbers = #tpu.dot_dimension_numbers<[1], [0], [0], [1], [0, 0, 1, 1], [], []>} : vector<8x8xbf16>, vector<8x9xbf16>, vector<8x9xf32> -> vector<8x9xf32>
    %25 = arith.addf %14, %24 : vector<8x9xf32>
    %cst_14 = arith.constant dense<0.000000e+00> : vector<8x32xf32>
    %26 = tpu.matmul %17, %3, %cst_14 {dimension_numbers = #tpu.dot_dimension_numbers<[1], [0], [0], [1], [0, 0, 1, 1], [], []>} : vector<8x9xbf16>, vector<9x32xbf16>, vector<8x32xf32> -> vector<8x32xf32>
    %27 = arith.maximumf %15, %26 : vector<8x32xf32>
    %c0_15 = arith.constant 0 : index
    %c0_16 = arith.constant 0 : index
    %28 = vector.load %arg9[%c0_15, %c0_16] : memref<1x32xf32, #tpu.memory_space<vmem>>, vector<1x32xf32>
    %29 = vector.broadcast %28 : vector<1x32xf32> to vector<8x32xf32>
    %30 = arith.addf %27, %29 : vector<8x32xf32>
    %31 = vector.extract_strided_slice %25 {offsets = [0, 8], sizes = [8, 1], strides = [1, 1]} : vector<8x9xf32> to vector<8x1xf32>
    %32 = vector.extract_strided_slice %25 {offsets = [0, 0], sizes = [8, 8], strides = [1, 1]} : vector<8x9xf32> to vector<8x8xf32>
    %cst_17 = arith.constant 1.000000e+00 : f32
    %33 = vector.broadcast %cst_17 : f32 to vector<8x1xf32>
    %34 = arith.maximumf %31, %33 : vector<8x1xf32>
    %35 = vector.broadcast %34 : vector<8x1xf32> to vector<8x8xf32>
    %36 = arith.divf %32, %35 : vector<8x8xf32>
    %37 = tpu.iota {dimensions = array<i32: 1>} : vector<8x10xi32>
    %c0_18 = arith.constant 0 : index
    %c0_19 = arith.constant 0 : index
    %c0_20 = arith.constant 0 : index
    %38 = vector.load %arg2[%c0_18, %c0_19, %c0_20] : memref<1x8x1xi32, #tpu.memory_space<vmem>>, vector<1x8x1xi32>
    %39 = vector.shape_cast %38 : vector<1x8x1xi32> to vector<8x1xi32>
    %40 = vector.broadcast %39 : vector<8x1xi32> to vector<8x10xi32>
    %41 = arith.cmpi eq, %37, %40 : vector<8x10xi32>
    %42 = arith.extui %41 : vector<8x10xi1> to vector<8x10xi32>
    %43 = arith.sitofp %42 : vector<8x10xi32> to vector<8x10xf32>
    %44 = arith.truncf %43 : vector<8x10xf32> to vector<8x10xbf16>
    %c0_21 = arith.constant 0 : index
    %c0_22 = arith.constant 0 : index
    %45 = vector.load %arg5[%c0_21, %c0_22] : memref<10x32xbf16, #tpu.memory_space<vmem>>, vector<10x32xbf16>
    %cst_23 = arith.constant dense<0.000000e+00> : vector<8x32xf32>
    %46 = tpu.matmul %44, %45, %cst_23 {dimension_numbers = #tpu.dot_dimension_numbers<[1], [0], [0], [1], [0, 0, 1, 1], [], []>} : vector<8x10xbf16>, vector<10x32xbf16>, vector<8x32xf32> -> vector<8x32xf32>
    %47 = arith.truncf %36 : vector<8x8xf32> to vector<8x8xbf16>
    %c0_24 = arith.constant 0 : index
    %c0_25 = arith.constant 0 : index
    %48 = vector.load %arg6[%c0_24, %c0_25] : memref<8x32xbf16, #tpu.memory_space<vmem>>, vector<8x32xbf16>
    %cst_26 = arith.constant dense<0.000000e+00> : vector<8x32xf32>
    %49 = tpu.matmul %47, %48, %cst_26 {dimension_numbers = #tpu.dot_dimension_numbers<[1], [0], [0], [1], [0, 0, 1, 1], [], []>} : vector<8x8xbf16>, vector<8x32xbf16>, vector<8x32xf32> -> vector<8x32xf32>
    %50 = arith.addf %46, %49 : vector<8x32xf32>
    %c0_27 = arith.constant 0 : index
    %c0_28 = arith.constant 0 : index
    %51 = vector.load %arg7[%c0_27, %c0_28] : memref<1x32xf32, #tpu.memory_space<vmem>>, vector<1x32xf32>
    %52 = vector.broadcast %51 : vector<1x32xf32> to vector<8x32xf32>
    %53 = arith.addf %50, %52 : vector<8x32xf32>
    %54 = arith.truncf %53 : vector<8x32xf32> to vector<8x32xbf16>
    %c0_29 = arith.constant 0 : index
    %c0_30 = arith.constant 0 : index
    %55 = vector.load %arg10[%c0_29, %c0_30] : memref<32x32xbf16, #tpu.memory_space<vmem>>, vector<32x32xbf16>
    %cst_31 = arith.constant dense<0.000000e+00> : vector<8x32xf32>
    %56 = tpu.matmul %54, %55, %cst_31 {dimension_numbers = #tpu.dot_dimension_numbers<[1], [0], [0], [1], [0, 0, 1, 1], [], []>} : vector<8x32xbf16>, vector<32x32xbf16>, vector<8x32xf32> -> vector<8x32xf32>
    %57 = arith.truncf %56 : vector<8x32xf32> to vector<8x32xbf16>
    %58 = arith.truncf %30 : vector<8x32xf32> to vector<8x32xbf16>
    %cst_32 = arith.constant dense<0.000000e+00> : vector<8x8xf32>
    %59 = tpu.matmul %57, %58, %cst_32 {dimension_numbers = #tpu.dot_dimension_numbers<[1], [1], [0], [0], [0, 0, 1, 0], [], []>} : vector<8x32xbf16>, vector<8x32xbf16>, vector<8x8xf32> -> vector<8x8xf32>
    %60 = tpu.iota {dimensions = array<i32: 0>} : vector<8x1xi32>
    %61 = tpu.iota {dimensions = array<i32: 1>} : vector<1x8xi32>
    %c1_i32 = arith.constant 1 : i32
    %62 = arith.muli %arg0, %c1_i32 : i32
    %c0_i32 = arith.constant 0 : i32
    %63 = arith.addi %62, %c0_i32 : i32
    %64 = arith.index_cast %63 : i32 to index
    %c0_33 = arith.constant 0 : index
    %65 = memref.load %arg1[%64, %c0_33] : memref<2x2xi32, #tpu.memory_space<smem>>
    %66 = arith.index_cast %63 : i32 to index
    %c1_34 = arith.constant 1 : index
    %67 = memref.load %arg1[%66, %c1_34] : memref<2x2xi32, #tpu.memory_space<smem>>
    %c0_i32_35 = arith.constant 0 : i32
    %68 = vector.broadcast %c0_i32_35 : i32 to vector<8x1xi32>
    %69 = arith.cmpi sge, %60, %68 : vector<8x1xi32>
    %c8_i32 = arith.constant 8 : i32
    %70 = vector.broadcast %c8_i32 : i32 to vector<8x1xi32>
    %71 = arith.cmpi slt, %60, %70 : vector<8x1xi32>
    %72 = arith.andi %69, %71 : vector<8x1xi1>
    %c0_i32_36 = arith.constant 0 : i32
    %73 = vector.broadcast %c0_i32_36 : i32 to vector<1x8xi32>
    %74 = arith.cmpi sge, %61, %73 : vector<1x8xi32>
    %c0_i32_37 = arith.constant 0 : i32
    %75 = arith.addi %c0_i32_37, %67 : i32
    %76 = vector.broadcast %75 : i32 to vector<1x8xi32>
    %77 = arith.cmpi slt, %61, %76 : vector<1x8xi32>
    %78 = arith.andi %74, %77 : vector<1x8xi1>
    %79 = vector.broadcast %72 : vector<8x1xi1> to vector<8x8xi1>
    %80 = vector.broadcast %78 : vector<1x8xi1> to vector<8x8xi1>
    %81 = arith.andi %79, %80 : vector<8x8xi1>
    %c0_i32_38 = arith.constant 0 : i32
    %82 = vector.broadcast %c0_i32_38 : i32 to vector<8x1xi32>
    %83 = arith.cmpi sge, %60, %82 : vector<8x1xi32>
    %c0_i32_39 = arith.constant 0 : i32
    %84 = arith.addi %c0_i32_39, %65 : i32
    %85 = vector.broadcast %84 : i32 to vector<8x1xi32>
    %86 = arith.cmpi slt, %60, %85 : vector<8x1xi32>
    %87 = arith.andi %83, %86 : vector<8x1xi1>
    %cst_40 = arith.constant -1.000000e+09 : f32
    %88 = vector.broadcast %cst_40 : f32 to vector<8x8xf32>
    %89 = arith.select %81, %59, %88 : vector<8x8xi1>, vector<8x8xf32>
    %cst_41 = arith.constant dense<0xFF800000> : vector<8xf32>
    %90 = vector.multi_reduction <maximumf>, %89, %cst_41 [1] : vector<8x8xf32> to vector<8xf32>
    %91 = vector.shape_cast %90 : vector<8xf32> to vector<8x1xf32>
    %92 = vector.broadcast %91 : vector<8x1xf32> to vector<8x8xf32>
    %93 = arith.subf %89, %92 : vector<8x8xf32>
    %94 = math.exp %93 : vector<8x8xf32>
    %95 = arith.extui %81 : vector<8x8xi1> to vector<8x8xi32>
    %96 = arith.sitofp %95 : vector<8x8xi32> to vector<8x8xf32>
    %97 = arith.mulf %94, %96 : vector<8x8xf32>
    %cst_42 = arith.constant dense<0.000000e+00> : vector<8xf32>
    %98 = vector.multi_reduction <add>, %97, %cst_42 [1] : vector<8x8xf32> to vector<8xf32>
    %99 = vector.shape_cast %98 : vector<8xf32> to vector<8x1xf32>
    %cst_43 = arith.constant 1.000000e-30 : f32
    %100 = vector.broadcast %cst_43 : f32 to vector<8x1xf32>
    %101 = arith.maximumf %99, %100 : vector<8x1xf32>
    %102 = vector.broadcast %101 : vector<8x1xf32> to vector<8x8xf32>
    %103 = arith.divf %97, %102 : vector<8x8xf32>
    %104 = arith.truncf %30 : vector<8x32xf32> to vector<8x32xbf16>
    %c0_44 = arith.constant 0 : index
    %c0_45 = arith.constant 0 : index
    %105 = vector.load %arg11[%c0_44, %c0_45] : memref<32x32xbf16, #tpu.memory_space<vmem>>, vector<32x32xbf16>
    %cst_46 = arith.constant dense<0.000000e+00> : vector<8x32xf32>
    %106 = tpu.matmul %104, %105, %cst_46 {dimension_numbers = #tpu.dot_dimension_numbers<[1], [0], [0], [1], [0, 0, 1, 1], [], []>} : vector<8x32xbf16>, vector<32x32xbf16>, vector<8x32xf32> -> vector<8x32xf32>
    %107 = arith.truncf %103 : vector<8x8xf32> to vector<8x8xbf16>
    %108 = arith.truncf %106 : vector<8x32xf32> to vector<8x32xbf16>
    %cst_47 = arith.constant dense<0.000000e+00> : vector<8x32xf32>
    %109 = tpu.matmul %107, %108, %cst_47 {dimension_numbers = #tpu.dot_dimension_numbers<[1], [0], [0], [1], [0, 0, 1, 1], [], []>} : vector<8x8xbf16>, vector<8x32xbf16>, vector<8x32xf32> -> vector<8x32xf32>
    %110 = arith.truncf %109 : vector<8x32xf32> to vector<8x32xbf16>
    %c0_48 = arith.constant 0 : index
    %c0_49 = arith.constant 0 : index
    %111 = vector.load %arg12[%c0_48, %c0_49] : memref<32x32xbf16, #tpu.memory_space<vmem>>, vector<32x32xbf16>
    %cst_50 = arith.constant dense<0.000000e+00> : vector<8x32xf32>
    %112 = tpu.matmul %110, %111, %cst_50 {dimension_numbers = #tpu.dot_dimension_numbers<[1], [0], [0], [1], [0, 0, 1, 1], [], []>} : vector<8x32xbf16>, vector<32x32xbf16>, vector<8x32xf32> -> vector<8x32xf32>
    %113 = arith.addf %53, %112 : vector<8x32xf32>
    %cst_51 = arith.constant 0.000000e+00 : f32
    %114 = vector.shape_cast %87 : vector<8x1xi1> to vector<8x1xi1>
    %115 = vector.broadcast %114 : vector<8x1xi1> to vector<8x32xi1>
    %116 = vector.broadcast %cst_51 : f32 to vector<8x32xf32>
    %117 = arith.select %115, %113, %116 : vector<8x32xi1>, vector<8x32xf32>
    %118 = arith.truncf %117 : vector<8x32xf32> to vector<8x32xbf16>
    %c0_52 = arith.constant 0 : index
    %c0_53 = arith.constant 0 : index
    %119 = vector.load %arg13[%c0_52, %c0_53] : memref<32x128xbf16, #tpu.memory_space<vmem>>, vector<32x128xbf16>
    %cst_54 = arith.constant dense<0.000000e+00> : vector<8x128xf32>
    %120 = tpu.matmul %118, %119, %cst_54 {dimension_numbers = #tpu.dot_dimension_numbers<[1], [0], [0], [1], [0, 0, 1, 1], [], []>} : vector<8x32xbf16>, vector<32x128xbf16>, vector<8x128xf32> -> vector<8x128xf32>
    %c0_55 = arith.constant 0 : index
    %c0_56 = arith.constant 0 : index
    %121 = vector.load %arg14[%c0_55, %c0_56] : memref<1x128xf32, #tpu.memory_space<vmem>>, vector<1x128xf32>
    %122 = vector.broadcast %121 : vector<1x128xf32> to vector<8x128xf32>
    %123 = arith.addf %120, %122 : vector<8x128xf32>
    %c0_57 = arith.constant 0 : index
    %c0_58 = arith.constant 0 : index
    %c0_59 = arith.constant 0 : index
    %124 = vector.load %arg15[%c0_57, %c0_58, %c0_59] : memref<1x8x128xf32, #tpu.memory_space<vmem>>, vector<1x8x128xf32>
    %125 = vector.shape_cast %124 : vector<1x8x128xf32> to vector<8x128xf32>
    %126 = vector.shape_cast %123 : vector<8x128xf32> to vector<1x8x128xf32>
    tpu.vector_store %arg15[%c0_57, %c0_58, %c0_59], %126 {strides = array<i32>} : memref<1x8x128xf32, #tpu.memory_space<vmem>>, vector<1x8x128xf32>,
    return
  }
  func.func @transform_0(%arg0: i32, %arg1: memref<2x2xi32, #tpu.memory_space<smem>>) -> (i32, i32, i32) {
    %c0_i32 = arith.constant 0 : i32
    %c0_i32_0 = arith.constant 0 : i32
    %c0_i32_1 = arith.constant 0 : i32
    return %arg0, %c0_i32, %c0_i32_0 : i32, i32, i32
  }
  func.func @transform_1(%arg0: i32, %arg1: memref<2x2xi32, #tpu.memory_space<smem>>) -> (i32, i32, i32) {
    %c0_i32 = arith.constant 0 : i32
    %c0_i32_0 = arith.constant 0 : i32
    %c0_i32_1 = arith.constant 0 : i32
    return %arg0, %c0_i32, %c0_i32_0 : i32, i32, i32
  }
  func.func @transform_2(%arg0: i32, %arg1: memref<2x2xi32, #tpu.memory_space<smem>>) -> (i32, i32, i32, i32) {
    %c0_i32 = arith.constant 0 : i32
    %c0_i32_0 = arith.constant 0 : i32
    %c0_i32_1 = arith.constant 0 : i32
    %c0_i32_2 = arith.constant 0 : i32
    return %arg0, %c0_i32, %c0_i32_0, %c0_i32_1 : i32, i32, i32, i32
  }
  func.func @transform_3(%arg0: i32, %arg1: memref<2x2xi32, #tpu.memory_space<smem>>) -> (i32, i32) {
    %c0_i32 = arith.constant 0 : i32
    %c0_i32_0 = arith.constant 0 : i32
    %c0_i32_1 = arith.constant 0 : i32
    return %c0_i32, %c0_i32_0 : i32, i32
  }
  func.func @transform_4(%arg0: i32, %arg1: memref<2x2xi32, #tpu.memory_space<smem>>) -> (i32, i32) {
    %c0_i32 = arith.constant 0 : i32
    %c0_i32_0 = arith.constant 0 : i32
    %c0_i32_1 = arith.constant 0 : i32
    return %c0_i32, %c0_i32_0 : i32, i32
  }
  func.func @transform_5(%arg0: i32, %arg1: memref<2x2xi32, #tpu.memory_space<smem>>) -> (i32, i32) {
    %c0_i32 = arith.constant 0 : i32
    %c0_i32_0 = arith.constant 0 : i32
    %c0_i32_1 = arith.constant 0 : i32
    return %c0_i32, %c0_i32_0 : i32, i32
  }
  func.func @transform_6(%arg0: i32, %arg1: memref<2x2xi32, #tpu.memory_space<smem>>) -> (i32, i32) {
    %c0_i32 = arith.constant 0 : i32
    %c0_i32_0 = arith.constant 0 : i32
    %c0_i32_1 = arith.constant 0 : i32
    return %c0_i32, %c0_i32_0 : i32, i32
  }
  func.func @transform_7(%arg0: i32, %arg1: memref<2x2xi32, #tpu.memory_space<smem>>) -> (i32, i32) {
    %c0_i32 = arith.constant 0 : i32
    %c0_i32_0 = arith.constant 0 : i32
    %c0_i32_1 = arith.constant 0 : i32
    return %c0_i32, %c0_i32_0 : i32, i32
  }
  func.func @transform_8(%arg0: i32, %arg1: memref<2x2xi32, #tpu.memory_space<smem>>) -> (i32, i32) {
    %c0_i32 = arith.constant 0 : i32
    %c0_i32_0 = arith.constant 0 : i32
    %c0_i32_1 = arith.constant 0 : i32
    return %c0_i32, %c0_i32_0 : i32, i32
  }
  func.func @transform_9(%arg0: i32, %arg1: memref<2x2xi32, #tpu.memory_space<smem>>) -> (i32, i32) {
    %c0_i32 = arith.constant 0 : i32
    %c0_i32_0 = arith.constant 0 : i32
    %c0_i32_1 = arith.constant 0 : i32
    return %c0_i32, %c0_i32_0 : i32, i32
  }
  func.func @transform_10(%arg0: i32, %arg1: memref<2x2xi32, #tpu.memory_space<smem>>) -> (i32, i32) {
    %c0_i32 = arith.constant 0 : i32
    %c0_i32_0 = arith.constant 0 : i32
    %c0_i32_1 = arith.constant 0 : i32
    return %c0_i32, %c0_i32_0 : i32, i32
  }
  func.func @transform_11(%arg0: i32, %arg1: memref<2x2xi32, #tpu.memory_space<smem>>) -> (i32, i32) {
    %c0_i32 = arith.constant 0 : i32
    %c0_i32_0 = arith.constant 0 : i32
    %c0_i32_1 = arith.constant 0 : i32
    return %c0_i32, %c0_i32_0 : i32, i32
  }
  func.func @transform_12(%arg0: i32, %arg1: memref<2x2xi32, #tpu.memory_space<smem>>) -> (i32, i32) {
    %c0_i32 = arith.constant 0 : i32
    %c0_i32_0 = arith.constant 0 : i32
    %c0_i32_1 = arith.constant 0 : i32
    return %c0_i32, %c0_i32_0 : i32, i32
  }
  func.func @transform_13(%arg0: i32, %arg1: memref<2x2xi32, #tpu.memory_space<smem>>) -> (i32, i32, i32) {
    %c0_i32 = arith.constant 0 : i32
    %c0_i32_0 = arith.constant 0 : i32
    %c0_i32_1 = arith.constant 0 : i32
    return %arg0, %c0_i32, %c0_i32_0 : i32, i32, i32
  }
}

</mosaic_0001>

<llo_original>
// kernel: fused_predictor_call.1
$region0: #{fused_predictor_call.1}
  #allocation0 [shape = 'u32[]', space=smem, size = 0x4, offset = 0x4, fixed_abs, tag = 'smem constant byte address 0x4 - core index']
  #allocation1 [shape = 'u32[72,128]{1,0:T(1,128)}', space=vmem, size = 0x9000, scoped, tag = 'internal scratch']
  #allocation2 [shape = 's32[1]{0}', space=sflag, size = 0x4, scoped, tag = 'scoped memory for fused_predictor_call.1']
  #allocation3 [shape = 'u8[1024]{0}', space=smem, size = 0x400, scoped, tag = 'prefetched SMEM operand 0']
  %s0 = inlined_call_operand.hbm [shape: s32[2,2], index: 0, kind: input, shape index: {}]
  %s1 = inlined_call_operand.vmem [shape: s32[2,8,1], index: 1, kind: input, shape index: {}]
  %s2 = inlined_call_operand.hbm [shape: s32[2,2,8], index: 2, kind: input, shape index: {}]
  %s3 = inlined_call_operand.vmem [shape: bf16[2,2,8,9], index: 3, kind: input, shape index: {}]
  %s4 = inlined_call_operand.hbm [shape: bf16[10,32], index: 4, kind: input, shape index: {}]
  %s5 = inlined_call_operand.hbm [shape: bf16[8,32], index: 5, kind: input, shape index: {}]
  %s6 = inlined_call_operand.hbm [shape: f32[1,32], index: 6, kind: input, shape index: {}]
  %s7 = inlined_call_operand.vmem [shape: bf16[9,32], index: 7, kind: input, shape index: {}]
  %s8 = inlined_call_operand.vmem [shape: f32[1,32], index: 8, kind: input, shape index: {}]
  %s9 = inlined_call_operand.hbm [shape: bf16[32,32], index: 9, kind: input, shape index: {}]
  %s10 = inlined_call_operand.hbm [shape: bf16[32,32], index: 10, kind: input, shape index: {}]
  %s11 = inlined_call_operand.hbm [shape: bf16[32,32], index: 11, kind: input, shape index: {}]
  %s12 = inlined_call_operand.hbm [shape: bf16[32,128], index: 12, kind: input, shape index: {}]
  %s13 = inlined_call_operand.vmem [shape: f32[1,128], index: 13, kind: input, shape index: {}]
  %s14 = inlined_call_operand.hbm [shape: f32[2,8,128], index: 14, kind: output, shape index: {}]
  %s15 = sld [smem:[#allocation0]]
  $region117: #{fused_predictor_call.1} parent=0
    _
  %s17 = ssub.s32 1, %s15
  %s18 = scalar_select 0, %s17, %s15
  %s20 = sshll.u32 %s0, 4
  %s21 = int_to_ptr.hbm [resolvable:$true] %s20
  %23 = dma.hbm_to_smem %s21, 32, [#allocation3], [#allocation2]
  %25 = dma.done [#allocation2], 32
  %26 = sfence
  $region1: #{fused_predictor_call.1} parent=0
    #allocation4 [shape = 'u8[2048]{0}', space=vmem, size = 0x800, scoped, tag = 'input window, operand 2']
    #allocation5 [shape = 's32[2]{0}', space=sflag, size = 0x8, scoped, tag = 'scoped memory for fused_predictor_call.1']
    #allocation6 [shape = 's32[2]{0}', space=sflag, size = 0x8, scoped, tag = 'scoped memory for fused_predictor_call.1']
    #allocation7 [shape = 'u8[4096]{0}', space=vmem, size = 0x1000, scoped, tag = 'input window, operand 4, single buffered']
    #allocation8 [shape = 's32[1]{0}', space=sflag, size = 0x4, scoped, tag = 'scoped memory for fused_predictor_call.1']
    #allocation9 [shape = 'u8[2048]{0}', space=vmem, size = 0x800, scoped, tag = 'input window, operand 5, single buffered']
    #allocation10 [shape = 'u8[512]{0}', space=vmem, size = 0x400, scoped, tag = 'input window, operand 6, single buffered']
    #allocation11 [shape = 's32[1]{0}', space=sflag, size = 0x4, scoped, tag = 'scoped memory for fused_predictor_call.1']
    #allocation12 [shape = 'u8[8192]{0}', space=vmem, size = 0x2000, scoped, tag = 'input window, operand 9, single buffered']
    #allocation13 [shape = 'u8[8192]{0}', space=vmem, size = 0x2000, scoped, tag = 'input window, operand 10, single buffered']
    #allocation14 [shape = 's32[1]{0}', space=sflag, size = 0x4, scoped, tag = 'scoped memory for fused_predictor_call.1']
    #allocation15 [shape = 'u8[8192]{0}', space=vmem, size = 0x2000, scoped, tag = 'input window, operand 11, single buffered']
    #allocation16 [shape = 'u8[8192]{0}', space=vmem, size = 0x2000, scoped, tag = 'input window, operand 12, single buffered']
    #allocation17 [shape = 's32[1]{0}', space=sflag, size = 0x4, scoped, tag = 'scoped memory for fused_predictor_call.1']
    #allocation18 [shape = 'u8[8192]{0}', space=vmem, size = 0x2000, scoped, tag = 'output window, operand 0']
    %27 = vsyncpa [#allocation5], 0
    %s28 = scalar_lea.sflag [#allocation5], 1
    %29 = vsyncpa %s28, 0
    %30 = vsyncpa [#allocation8], 0
    %31 = vsyncpa [#allocation11], 0
    %32 = vsyncpa [#allocation14], 0
    %33 = vsyncpa [#allocation17], 0
    %34 = vsyncpa [#allocation6], 0
    %s35 = scalar_lea.sflag [#allocation6], 1
    %36 = vsyncpa %s35, 0
    loop: start=0, step=1, limit=4
    $region2: #{fused_predictor_call.1} parent=1 // loop_pre_header
      _
    $region3: #{fused_predictor_call.1} parent=1 // loop_header
      %s38 = sphi 0, %s42
      %p39 = scmp.ge.s32.totalorder %s38, 4
      %s48 = sphi 0, %s50
      %s51 = sphi 0, %s48
      %s52 = sphi 0, %s51
      %s68 = sphi 0, %s52
      %s74 = sphi 0, %s76
      %s77 = sphi 0, %s74
      %s78 = sphi 0, %s77
      %s94 = sphi 0, %s78
      %s100 = sphi 0, %s102
      %s103 = sphi 0, %s100
      %s104 = sphi 0, %s103
      %s120 = sphi 0, %s104
      %s124 = sphi 0, %s124
      %s126 = sphi 0, %s124
      %s127 = sphi 0, %s126
      %s141 = sphi 0, %s127
      %s145 = sphi 0, %s145
      %s147 = sphi 0, %s145
      %s148 = sphi 0, %s147
      %s162 = sphi 0, %s148
      %s166 = sphi 0, %s166
      %s168 = sphi 0, %s166
      %s169 = sphi 0, %s168
      %s183 = sphi 0, %s169
      %s187 = sphi 0, %s187
      %s189 = sphi 0, %s187
      %s190 = sphi 0, %s189
      %s204 = sphi 0, %s190
      %s208 = sphi 0, %s208
      %s210 = sphi 0, %s208
      %s211 = sphi 0, %s210
      %s225 = sphi 0, %s211
      %s229 = sphi 0, %s229
      %s231 = sphi 0, %s229
      %s232 = sphi 0, %s231
      %s246 = sphi 0, %s232
      %s250 = sphi 0, %s250
      %s252 = sphi 0, %s250
      %s253 = sphi 0, %s252
      %s267 = sphi 0, %s253
      %s271 = sphi 0, %s271
      %s273 = sphi 0, %s271
      %s274 = sphi 0, %s273
      %s288 = sphi 0, %s274
      %s292 = sphi 0, %s292
      %s294 = sphi 0, %s292
      %s295 = sphi 0, %s294
      %s309 = sphi 0, %s295
      %s313 = sphi 0, %s313
      %s315 = sphi 0, %s313
      %s316 = sphi 0, %s315
      %s330 = sphi 0, %s316
      %s336 = sphi 0, %s338
      %s339 = sphi 0, %s336
      %s340 = sphi 0, %s339
      %s356 = sphi 0, %s340
    $region4: #{fused_predictor_call.1} parent=1 // loop_header_branch
      %41 = sbr.rel (%p39) target = $region8
    $region5: #{fused_predictor_call.1} parent=1 // loop_body
      %s43 = ssub.s32 %s38, 1
      %s44 = ssub.s32 %s38, 2
      %s45 = sadd.s32 %s38, 1
      %s46 = ssub.s32 %s38, %s45
      %p47 = scmp.eq.s32.totalorder %s46, 0
      %s49 = sadd.s32 %s48, 1
      %s50 = scalar_select %p47, %s48, %s49
      %p53 = pneg %p47
      %p54 = scmp.eq.s32.totalorder %s38, 1
      %p55 = por %p53, %p54
      %p56 = scmp.ne.s32.totalorder %s48, %s51
      %p57 = scmp.eq.s32.totalorder %s38, 0
      %p58 = por %p56, %p57
      %p59 = scmp.ne.s32.totalorder %s48, %s51
      %p60 = scmp.eq.s32.totalorder %s43, 1
      %p61 = por %p59, %p60
      %p62 = scmp.ne.s32.totalorder %s51, %s52
      %p63 = scmp.eq.s32.totalorder %s43, 0
      %p64 = por %p62, %p63
      %p65 = scmp.ne.s32.totalorder %s51, %s52
      %p66 = scmp.eq.s32.totalorder %s44, 1
      %p67 = por %p65, %p66
      %p69 = scmp.ne.s32.totalorder %s52, %s68
      %p70 = scmp.eq.s32.totalorder %s44, 0
      %p71 = por %p69, %p70
      %s72 = ssub.s32 %s38, %s45
      %p73 = scmp.eq.s32.totalorder %s72, 0
      %s75 = sadd.s32 %s74, 1
      %s76 = scalar_select %p73, %s74, %s75
      %p79 = pneg %p73
      %p80 = scmp.eq.s32.totalorder %s38, 1
      %p81 = por %p79, %p80
      %p82 = scmp.ne.s32.totalorder %s74, %s77
      %p83 = scmp.eq.s32.totalorder %s38, 0
      %p84 = por %p82, %p83
      %p85 = scmp.ne.s32.totalorder %s74, %s77
      %p86 = scmp.eq.s32.totalorder %s43, 1
      %p87 = por %p85, %p86
      %p88 = scmp.ne.s32.totalorder %s77, %s78
      %p89 = scmp.eq.s32.totalorder %s43, 0
      %p90 = por %p88, %p89
      %p91 = scmp.ne.s32.totalorder %s77, %s78
      %p92 = scmp.eq.s32.totalorder %s44, 1
      %p93 = por %p91, %p92
      %p95 = scmp.ne.s32.totalorder %s78, %s94
      %p96 = scmp.eq.s32.totalorder %s44, 0
      %p97 = por %p95, %p96
      %s98 = ssub.s32 %s38, %s45
      %p99 = scmp.eq.s32.totalorder %s98, 0
      %s101 = sadd.s32 %s100, 1
      %s102 = scalar_select %p99, %s100, %s101
      %p105 = pneg %p99
      %p106 = scmp.eq.s32.totalorder %s38, 1
      %p107 = por %p105, %p106
      %p108 = scmp.ne.s32.totalorder %s100, %s103
      %p109 = scmp.eq.s32.totalorder %s38, 0
      %p110 = por %p108, %p109
      %p111 = scmp.ne.s32.totalorder %s100, %s103
      %p112 = scmp.eq.s32.totalorder %s43, 1
      %p113 = por %p111, %p112
      %p114 = scmp.ne.s32.totalorder %s103, %s104
      %p115 = scmp.eq.s32.totalorder %s43, 0
      %p116 = por %p114, %p115
      %p117 = scmp.ne.s32.totalorder %s103, %s104
      %p118 = scmp.eq.s32.totalorder %s44, 1
      %p119 = por %p117, %p118
      %p121 = scmp.ne.s32.totalorder %s104, %s120
      %p122 = scmp.eq.s32.totalorder %s44, 0
      %p123 = por %p121, %p122
      %s125 = sadd.s32 %s124, 1
      %p128 = scmp.eq.s32.totalorder %s38, 1
      %p129 = scmp.ne.s32.totalorder %s124, %s126
      %p130 = scmp.eq.s32.totalorder %s38, 0
      %p131 = por %p129, %p130
      %p132 = scmp.ne.s32.totalorder %s124, %s126
      %p133 = scmp.eq.s32.totalorder %s43, 1
      %p134 = por %p132, %p133
      %p135 = scmp.ne.s32.totalorder %s126, %s127
      %p136 = scmp.eq.s32.totalorder %s43, 0
      %p137 = por %p135, %p136
      %p138 = scmp.ne.s32.totalorder %s126, %s127
      %p139 = scmp.eq.s32.totalorder %s44, 1
      %p140 = por %p138, %p139
      %p142 = scmp.ne.s32.totalorder %s127, %s141
      %p143 = scmp.eq.s32.totalorder %s44, 0
      %p144 = por %p142, %p143
      %s146 = sadd.s32 %s145, 1
      %p149 = scmp.eq.s32.totalorder %s38, 1
      %p150 = scmp.ne.s32.totalorder %s145, %s147
      %p151 = scmp.eq.s32.totalorder %s38, 0
      %p152 = por %p150, %p151
      %p153 = scmp.ne.s32.totalorder %s145, %s147
      %p154 = scmp.eq.s32.totalorder %s43, 1
      %p155 = por %p153, %p154
      %p156 = scmp.ne.s32.totalorder %s147, %s148
      %p157 = scmp.eq.s32.totalorder %s43, 0
      %p158 = por %p156, %p157
      %p159 = scmp.ne.s32.totalorder %s147, %s148
      %p160 = scmp.eq.s32.totalorder %s44, 1
      %p161 = por %p159, %p160
      %p163 = scmp.ne.s32.totalorder %s148, %s162
      %p164 = scmp.eq.s32.totalorder %s44, 0
      %p165 = por %p163, %p164
      %s167 = sadd.s32 %s166, 1
      %p170 = scmp.eq.s32.totalorder %s38, 1
      %p171 = scmp.ne.s32.totalorder %s166, %s168
      %p172 = scmp.eq.s32.totalorder %s38, 0
      %p173 = por %p171, %p172
      %p174 = scmp.ne.s32.totalorder %s166, %s168
      %p175 = scmp.eq.s32.totalorder %s43, 1
      %p176 = por %p174, %p175
      %p177 = scmp.ne.s32.totalorder %s168, %s169
      %p178 = scmp.eq.s32.totalorder %s43, 0
      %p179 = por %p177, %p178
      %p180 = scmp.ne.s32.totalorder %s168, %s169
      %p181 = scmp.eq.s32.totalorder %s44, 1
      %p182 = por %p180, %p181
      %p184 = scmp.ne.s32.totalorder %s169, %s183
      %p185 = scmp.eq.s32.totalorder %s44, 0
      %p186 = por %p184, %p185
      %s188 = sadd.s32 %s187, 1
      %p191 = scmp.eq.s32.totalorder %s38, 1
      %p192 = scmp.ne.s32.totalorder %s187, %s189
      %p193 = scmp.eq.s32.totalorder %s38, 0
      %p194 = por %p192, %p193
      %p195 = scmp.ne.s32.totalorder %s187, %s189
      %p196 = scmp.eq.s32.totalorder %s43, 1
      %p197 = por %p195, %p196
      %p198 = scmp.ne.s32.totalorder %s189, %s190
      %p199 = scmp.eq.s32.totalorder %s43, 0
      %p200 = por %p198, %p199
      %p201 = scmp.ne.s32.totalorder %s189, %s190
      %p202 = scmp.eq.s32.totalorder %s44, 1
      %p203 = por %p201, %p202
      %p205 = scmp.ne.s32.totalorder %s190, %s204
      %p206 = scmp.eq.s32.totalorder %s44, 0
      %p207 = por %p205, %p206
      %s209 = sadd.s32 %s208, 1
      %p212 = scmp.eq.s32.totalorder %s38, 1
      %p213 = scmp.ne.s32.totalorder %s208, %s210
      %p214 = scmp.eq.s32.totalorder %s38, 0
      %p215 = por %p213, %p214
      %p216 = scmp.ne.s32.totalorder %s208, %s210
      %p217 = scmp.eq.s32.totalorder %s43, 1
      %p218 = por %p216, %p217
      %p219 = scmp.ne.s32.totalorder %s210, %s211
      %p220 = scmp.eq.s32.totalorder %s43, 0
      %p221 = por %p219, %p220
      %p222 = scmp.ne.s32.totalorder %s210, %s211
      %p223 = scmp.eq.s32.totalorder %s44, 1
      %p224 = por %p222, %p223
      %p226 = scmp.ne.s32.totalorder %s211, %s225
      %p227 = scmp.eq.s32.totalorder %s44, 0
      %p228 = por %p226, %p227
      %s230 = sadd.s32 %s229, 1
      %p233 = scmp.eq.s32.totalorder %s38, 1
      %p234 = scmp.ne.s32.totalorder %s229, %s231
      %p235 = scmp.eq.s32.totalorder %s38, 0
      %p236 = por %p234, %p235
      %p237 = scmp.ne.s32.totalorder %s229, %s231
      %p238 = scmp.eq.s32.totalorder %s43, 1
      %p239 = por %p237, %p238
      %p240 = scmp.ne.s32.totalorder %s231, %s232
      %p241 = scmp.eq.s32.totalorder %s43, 0
      %p242 = por %p240, %p241
      %p243 = scmp.ne.s32.totalorder %s231, %s232
      %p244 = scmp.eq.s32.totalorder %s44, 1
      %p245 = por %p243, %p244
      %p247 = scmp.ne.s32.totalorder %s232, %s246
      %p248 = scmp.eq.s32.totalorder %s44, 0
      %p249 = por %p247, %p248
      %s251 = sadd.s32 %s250, 1
      %p254 = scmp.eq.s32.totalorder %s38, 1
      %p255 = scmp.ne.s32.totalorder %s250, %s252
      %p256 = scmp.eq.s32.totalorder %s38, 0
      %p257 = por %p255, %p256
      %p258 = scmp.ne.s32.totalorder %s250, %s252
      %p259 = scmp.eq.s32.totalorder %s43, 1
      %p260 = por %p258, %p259
      %p261 = scmp.ne.s32.totalorder %s252, %s253
      %p262 = scmp.eq.s32.totalorder %s43, 0
      %p263 = por %p261, %p262
      %p264 = scmp.ne.s32.totalorder %s252, %s253
      %p265 = scmp.eq.s32.totalorder %s44, 1
      %p266 = por %p264, %p265
      %p268 = scmp.ne.s32.totalorder %s253, %s267
      %p269 = scmp.eq.s32.totalorder %s44, 0
      %p270 = por %p268, %p269
      %s272 = sadd.s32 %s271, 1
      %p275 = scmp.eq.s32.totalorder %s38, 1
      %p276 = scmp.ne.s32.totalorder %s271, %s273
      %p277 = scmp.eq.s32.totalorder %s38, 0
      %p278 = por %p276, %p277
      %p279 = scmp.ne.s32.totalorder %s271, %s273
      %p280 = scmp.eq.s32.totalorder %s43, 1
      %p281 = por %p279, %p280
      %p282 = scmp.ne.s32.totalorder %s273, %s274
      %p283 = scmp.eq.s32.totalorder %s43, 0
      %p284 = por %p282, %p283
      %p285 = scmp.ne.s32.totalorder %s273, %s274
      %p286 = scmp.eq.s32.totalorder %s44, 1
      %p287 = por %p285, %p286
      %p289 = scmp.ne.s32.totalorder %s274, %s288
      %p290 = scmp.eq.s32.totalorder %s44, 0
      %p291 = por %p289, %p290
      %s293 = sadd.s32 %s292, 1
      %p296 = scmp.eq.s32.totalorder %s38, 1
      %p297 = scmp.ne.s32.totalorder %s292, %s294
      %p298 = scmp.eq.s32.totalorder %s38, 0
      %p299 = por %p297, %p298
      %p300 = scmp.ne.s32.totalorder %s292, %s294
      %p301 = scmp.eq.s32.totalorder %s43, 1
      %p302 = por %p300, %p301
      %p303 = scmp.ne.s32.totalorder %s294, %s295
      %p304 = scmp.eq.s32.totalorder %s43, 0
      %p305 = por %p303, %p304
      %p306 = scmp.ne.s32.totalorder %s294, %s295
      %p307 = scmp.eq.s32.totalorder %s44, 1
      %p308 = por %p306, %p307
      %p310 = scmp.ne.s32.totalorder %s295, %s309
      %p311 = scmp.eq.s32.totalorder %s44, 0
      %p312 = por %p310, %p311
      %s314 = sadd.s32 %s313, 1
      %p317 = scmp.eq.s32.totalorder %s38, 1
      %p318 = scmp.ne.s32.totalorder %s313, %s315
      %p319 = scmp.eq.s32.totalorder %s38, 0
      %p320 = por %p318, %p319
      %p321 = scmp.ne.s32.totalorder %s313, %s315
      %p322 = scmp.eq.s32.totalorder %s43, 1
      %p323 = por %p321, %p322
      %p324 = scmp.ne.s32.totalorder %s315, %s316
      %p325 = scmp.eq.s32.totalorder %s43, 0
      %p326 = por %p324, %p325
      %p327 = scmp.ne.s32.totalorder %s315, %s316
      %p328 = scmp.eq.s32.totalorder %s44, 1
      %p329 = por %p327, %p328
      %p331 = scmp.ne.s32.totalorder %s316, %s330
      %p332 = scmp.eq.s32.totalorder %s44, 0
      %p333 = por %p331, %p332
      %s334 = ssub.s32 %s38, %s45
      %p335 = scmp.eq.s32.totalorder %s334, 0
      %s337 = sadd.s32 %s336, 1
      %s338 = scalar_select %p335, %s336, %s337
      %p341 = pneg %p335
      %p342 = scmp.eq.s32.totalorder %s38, 1
      %p343 = por %p341, %p342
      %p344 = scmp.ne.s32.totalorder %s336, %s339
      %p345 = scmp.eq.s32.totalorder %s38, 0
      %p346 = por %p344, %p345
      %p347 = scmp.ne.s32.totalorder %s336, %s339
      %p348 = scmp.eq.s32.totalorder %s43, 1
      %p349 = por %p347, %p348
      %p350 = scmp.ne.s32.totalorder %s339, %s340
      %p351 = scmp.eq.s32.totalorder %s43, 0
      %p352 = por %p350, %p351
      %p353 = scmp.ne.s32.totalorder %s339, %s340
      %p354 = scmp.eq.s32.totalorder %s44, 1
      %p355 = por %p353, %p354
      %p357 = scmp.ne.s32.totalorder %s340, %s356
      %p358 = scmp.eq.s32.totalorder %s44, 0
      %p359 = por %p357, %p358
      %p360 = scmp.le.s32.totalorder 1, %s38
      %p361 = scmp.lt.s32.totalorder %s38, 3
      %p362 = pnand %p360, %p361
      %p363 = pneg %p362
      // Predicated region
      $region9: #{fused_predictor_call.1} parent=5 // pred_check
        _
      $region10: #{fused_predictor_call.1} parent=5 // pred_check_branch
        %365 = sbr.rel (%p362) target = $region12
      $region11: #{fused_predictor_call.1} parent=5 // pred_region
        %s366 = ssub.s32 %s38, 1
        // Predicated region
        $region13: #{fused_predictor_call.1} parent=11 // pred_check
          %p367 = pneg %p137
        $region14: #{fused_predictor_call.1} parent=11 // pred_check_branch
          %369 = sbr.rel (%p367) target = $region16
        $region15: #{fused_predictor_call.1} parent=11 // pred_region
          %371 = vsyncadd [#allocation8], 0
          %s372 = sshll.u32 %s4, 4
          %s373 = int_to_ptr.hbm [resolvable:$true] %s372
          %s374 = sshll.u32 [#allocation7], 4
          %s375 = int_to_ptr.vmem [resolvable:$true] %s374
          %380 = dma.hbm_to_vmem [thread:$0]  %s373, 128, %s375, [#allocation8], 64, 64, 4
        $region16: #{fused_predictor_call.1} parent=11 // pred_fallthru
          _
        // Predicated region
        $region17: #{fused_predictor_call.1} parent=11 // pred_check
          %p381 = pneg %p158
        $region18: #{fused_predictor_call.1} parent=11 // pred_check_branch
          %383 = sbr.rel (%p381) target = $region20
        $region19: #{fused_predictor_call.1} parent=11 // pred_region
          %385 = vsyncadd [#allocation8], 0
          %s387 = sshll.u32 %s5, 4
          %s388 = int_to_ptr.hbm [resolvable:$true] %s387
          %s389 = sshll.u32 [#allocation9], 4
          %s390 = int_to_ptr.vmem [resolvable:$true] %s389
          %392 = dma.hbm_to_vmem [thread:$0]  %s388, 64, %s390, [#allocation8]
        $region20: #{fused_predictor_call.1} parent=11 // pred_fallthru
          _
        // Predicated region
        $region21: #{fused_predictor_call.1} parent=11 // pred_check
          %p393 = pneg %p179
        $region22: #{fused_predictor_call.1} parent=11 // pred_check_branch
          %395 = sbr.rel (%p393) target = $region24
        $region23: #{fused_predictor_call.1} parent=11 // pred_region
          %397 = vsyncadd [#allocation11], 0
          %s399 = sshll.u32 %s6, 4
          %s400 = int_to_ptr.hbm [resolvable:$true] %s399
          %s401 = sshll.u32 [#allocation10], 4
          %s402 = int_to_ptr.vmem [resolvable:$true] %s401
          %404 = dma.hbm_to_vmem [thread:$0]  %s400, 16, %s402, [#allocation11]
        $region24: #{fused_predictor_call.1} parent=11 // pred_fallthru
          _
        // Predicated region
        $region25: #{fused_predictor_call.1} parent=11 // pred_check
          %p405 = pneg %p200
        $region26: #{fused_predictor_call.1} parent=11 // pred_check_branch
          %407 = sbr.rel (%p405) target = $region28
        $region27: #{fused_predictor_call.1} parent=11 // pred_region
          _
        $region28: #{fused_predictor_call.1} parent=11 // pred_fallthru
          _
        // Predicated region
        $region29: #{fused_predictor_call.1} parent=11 // pred_check
          %p408 = pneg %p221
        $region30: #{fused_predictor_call.1} parent=11 // pred_check_branch
          %410 = sbr.rel (%p408) target = $region32
        $region31: #{fused_predictor_call.1} parent=11 // pred_region
          _
        $region32: #{fused_predictor_call.1} parent=11 // pred_fallthru
          _
        // Predicated region
        $region33: #{fused_predictor_call.1} parent=11 // pred_check
          %p411 = pneg %p242
        $region34: #{fused_predictor_call.1} parent=11 // pred_check_branch
          %413 = sbr.rel (%p411) target = $region36
        $region35: #{fused_predictor_call.1} parent=11 // pred_region
          %415 = vsyncadd [#allocation11], 0
          %s416 = sshll.u32 %s9, 4
          %s417 = int_to_ptr.hbm [resolvable:$true] %s416
          %s418 = sshll.u32 [#allocation12], 4
          %s419 = int_to_ptr.vmem [resolvable:$true] %s418
          %424 = dma.hbm_to_vmem [thread:$0]  %s417, 256, %s419, [#allocation11], 64, 64, 4
        $region36: #{fused_predictor_call.1} parent=11 // pred_fallthru
          _
        // Predicated region
        $region37: #{fused_predictor_call.1} parent=11 // pred_check
          %p425 = pneg %p263
        $region38: #{fused_predictor_call.1} parent=11 // pred_check_branch
          %427 = sbr.rel (%p425) target = $region40
        $region39: #{fused_predictor_call.1} parent=11 // pred_region
          %429 = vsyncadd [#allocation14], 0
          %s430 = sshll.u32 %s10, 4
          %s431 = int_to_ptr.hbm [resolvable:$true] %s430
          %s432 = sshll.u32 [#allocation13], 4
          %s433 = int_to_ptr.vmem [resolvable:$true] %s432
          %438 = dma.hbm_to_vmem [thread:$0]  %s431, 256, %s433, [#allocation14], 64, 64, 4
        $region40: #{fused_predictor_call.1} parent=11 // pred_fallthru
          _
        // Predicated region
        $region41: #{fused_predictor_call.1} parent=11 // pred_check
          %p439 = pneg %p284
        $region42: #{fused_predictor_call.1} parent=11 // pred_check_branch
          %441 = sbr.rel (%p439) target = $region44
        $region43: #{fused_predictor_call.1} parent=11 // pred_region
          %443 = vsyncadd [#allocation14], 0
          %s444 = sshll.u32 %s11, 4
          %s445 = int_to_ptr.hbm [resolvable:$true] %s444
          %s446 = sshll.u32 [#allocation15], 4
          %s447 = int_to_ptr.vmem [resolvable:$true] %s446
          %452 = dma.hbm_to_vmem [thread:$0]  %s445, 256, %s447, [#allocation14], 64, 64, 4
        $region44: #{fused_predictor_call.1} parent=11 // pred_fallthru
          _
        // Predicated region
        $region45: #{fused_predictor_call.1} parent=11 // pred_check
          %p453 = pneg %p305
        $region46: #{fused_predictor_call.1} parent=11 // pred_check_branch
          %455 = sbr.rel (%p453) target = $region48
        $region47: #{fused_predictor_call.1} parent=11 // pred_region
          %457 = vsyncadd [#allocation17], 0
          %s458 = sshll.u32 %s12, 4
          %s459 = int_to_ptr.hbm [resolvable:$true] %s458
          %s460 = sshll.u32 [#allocation16], 4
          %s461 = int_to_ptr.vmem [resolvable:$true] %s460
          %466 = dma.hbm_to_vmem [thread:$0]  %s459, 256, %s461, [#allocation17], 64, 64, 4
        $region48: #{fused_predictor_call.1} parent=11 // pred_fallthru
          _
        // Predicated region
        $region49: #{fused_predictor_call.1} parent=11 // pred_check
          %p467 = pneg %p326
        $region50: #{fused_predictor_call.1} parent=11 // pred_check_branch
          %469 = sbr.rel (%p467) target = $region52
        $region51: #{fused_predictor_call.1} parent=11 // pred_region
          _
        $region52: #{fused_predictor_call.1} parent=11 // pred_fallthru
          _
      $region12: #{fused_predictor_call.1} parent=5 // pred_fallthru
        _
      %p470 = scmp.lt.s32.totalorder %s38, 2
      // Predicated region
      $region53: #{fused_predictor_call.1} parent=5 // pred_check
        %p471 = pneg %p470
      $region54: #{fused_predictor_call.1} parent=5 // pred_check_branch
        %473 = sbr.rel (%p471) target = $region56
      $region55: #{fused_predictor_call.1} parent=5 // pred_region
        // Predicated region
        $region57: #{fused_predictor_call.1} parent=55 // pred_check
          %p474 = pneg %p58
        $region58: #{fused_predictor_call.1} parent=55 // pred_check_branch
          %476 = sbr.rel (%p474) target = $region60
        $region59: #{fused_predictor_call.1} parent=55 // pred_region
          %p477 = scmp.lt.s32.totalorder %s38, 1
          %s478 = scalar_select %p477, %s38, 1
          %s479 = smul.addr %s478, 8
          %s480 = scalar_lea.vmem %s1, %s479
        $region60: #{fused_predictor_call.1} parent=55 // pred_fallthru
          _
        // Predicated region
        $region61: #{fused_predictor_call.1} parent=55 // pred_check
          %p481 = pneg %p84
        $region62: #{fused_predictor_call.1} parent=55 // pred_check_branch
          %483 = sbr.rel (%p481) target = $region64
        $region63: #{fused_predictor_call.1} parent=55 // pred_region
          %s484 = sand.u32 %s74, 1
          %s485 = scalar_lea.sflag [#allocation5], %s484
          %s486 = sand.u32 %s74, 1
          %s487 = smul.addr %s486, 2
          %s488 = scalar_lea.vmem [#allocation4], %s487
          %490 = vsyncadd %s485, 0
          %s491 = smul.addr %s38, 2
          %s492 = scalar_lea.hbm %s2, %s491
          %s494 = sshll.u32 %s492, 4
          %s495 = int_to_ptr.hbm [resolvable:$true] %s494
          %s496 = sshll.u32 %s488, 4
          %s497 = int_to_ptr.vmem [resolvable:$true] %s496
          %499 = dma.hbm_to_vmem [thread:$0]  %s495, 32, %s497, %s485
        $region64: #{fused_predictor_call.1} parent=55 // pred_fallthru
          _
        // Predicated region
        $region65: #{fused_predictor_call.1} parent=55 // pred_check
          %p500 = pneg %p110
        $region66: #{fused_predictor_call.1} parent=55 // pred_check_branch
          %502 = sbr.rel (%p500) target = $region68
        $region67: #{fused_predictor_call.1} parent=55 // pred_region
          %p503 = scmp.lt.s32.totalorder %s38, 1
          %s504 = scalar_select %p503, %s38, 1
          %s505 = smul.addr %s504, 2
          %s506 = smul.addr %s505, 4
          %s507 = scalar_lea.vmem %s3, %s506
        $region68: #{fused_predictor_call.1} parent=55 // pred_fallthru
          _
      $region56: #{fused_predictor_call.1} parent=5 // pred_fallthru
        _
      %p508 = scmp.le.s32.totalorder 1, %s38
      %p509 = scmp.lt.s32.totalorder %s38, 3
      %p510 = pnand %p508, %p509
      %p511 = pneg %p510
      // Predicated region
      $region69: #{fused_predictor_call.1} parent=5 // pred_check
        _
      $region70: #{fused_predictor_call.1} parent=5 // pred_check_branch
        %513 = sbr.rel (%p510) target = $region72
      $region71: #{fused_predictor_call.1} parent=5 // pred_region
        %s514 = ssub.s32 %s38, 1
        %s515 = sand.u32 %s77, 1
        %s516 = scalar_lea.sflag [#allocation5], %s515
        %s517 = sand.u32 %s77, 1
        %s518 = smul.addr %s517, 2
        %s519 = scalar_lea.vmem [#allocation4], %s518
        // Predicated region
        $region73: #{fused_predictor_call.1} parent=71 // pred_check
          %p520 = pneg %p90
        $region74: #{fused_predictor_call.1} parent=71 // pred_check_branch
          %522 = sbr.rel (%p520) target = $region76
        $region75: #{fused_predictor_call.1} parent=71 // pred_region
          %524 = dma.done %s516, 32
        $region76: #{fused_predictor_call.1} parent=71 // pred_fallthru
          _
        // Predicated region
        $region77: #{fused_predictor_call.1} parent=71 // pred_check
          %p525 = pneg %p137
        $region78: #{fused_predictor_call.1} parent=71 // pred_check_branch
          %527 = sbr.rel (%p525) target = $region80
        $region79: #{fused_predictor_call.1} parent=71 // pred_region
          %529 = dma.done [#allocation8], 128
        $region80: #{fused_predictor_call.1} parent=71 // pred_fallthru
          _
        // Predicated region
        $region81: #{fused_predictor_call.1} parent=71 // pred_check
          %p530 = pneg %p158
        $region82: #{fused_predictor_call.1} parent=71 // pred_check_branch
          %532 = sbr.rel (%p530) target = $region84
        $region83: #{fused_predictor_call.1} parent=71 // pred_region
          %534 = dma.done [#allocation8], 64
        $region84: #{fused_predictor_call.1} parent=71 // pred_fallthru
          _
        // Predicated region
        $region85: #{fused_predictor_call.1} parent=71 // pred_check
          %p535 = pneg %p179
        $region86: #{fused_predictor_call.1} parent=71 // pred_check_branch
          %537 = sbr.rel (%p535) target = $region88
        $region87: #{fused_predictor_call.1} parent=71 // pred_region
          %539 = dma.done [#allocation11], 16
        $region88: #{fused_predictor_call.1} parent=71 // pred_fallthru
          _
        // Predicated region
        $region89: #{fused_predictor_call.1} parent=71 // pred_check
          %p540 = pneg %p242
        $region90: #{fused_predictor_call.1} parent=71 // pred_check_branch
          %542 = sbr.rel (%p540) target = $region92
        $region91: #{fused_predictor_call.1} parent=71 // pred_region
          %544 = dma.done [#allocation11], 256
        $region92: #{fused_predictor_call.1} parent=71 // pred_fallthru
          _
        // Predicated region
        $region93: #{fused_predictor_call.1} parent=71 // pred_check
          %p545 = pneg %p263
        $region94: #{fused_predictor_call.1} parent=71 // pred_check_branch
          %547 = sbr.rel (%p545) target = $region96
        $region95: #{fused_predictor_call.1} parent=71 // pred_region
          %549 = dma.done [#allocation14], 256
        $region96: #{fused_predictor_call.1} parent=71 // pred_fallthru
          _
        // Predicated region
        $region97: #{fused_predictor_call.1} parent=71 // pred_check
          %p550 = pneg %p284
        $region98: #{fused_predictor_call.1} parent=71 // pred_check_branch
          %552 = sbr.rel (%p550) target = $region100
        $region99: #{fused_predictor_call.1} parent=71 // pred_region
          %554 = dma.done [#allocation14], 256
        $region100: #{fused_predictor_call.1} parent=71 // pred_fallthru
          _
        // Predicated region
        $region101: #{fused_predictor_call.1} parent=71 // pred_check
          %p555 = pneg %p305
        $region102: #{fused_predictor_call.1} parent=71 // pred_check_branch
          %557 = sbr.rel (%p555) target = $region104
        $region103: #{fused_predictor_call.1} parent=71 // pred_region
          %559 = dma.done [#allocation17], 256
        $region104: #{fused_predictor_call.1} parent=71 // pred_fallthru
          _
        %p560 = scmp.lt.s32.totalorder %s43, 1
        %s561 = scalar_select %p560, %s43, 1
        %s562 = smul.addr %s561, 8
        %s563 = scalar_lea.vmem %s1, %s562
        %p564 = pneg %p64
        %p565 = pneg %p61
        %s566 = sand.u32 %s77, 1
        %s567 = scalar_lea.sflag [#allocation5], %s566
        %s568 = sand.u32 %s77, 1
        %s569 = smul.addr %s568, 2
        %s570 = scalar_lea.vmem [#allocation4], %s569
        %p571 = pneg %p90
        %p572 = pneg %p87
        %p573 = scmp.lt.s32.totalorder %s43, 1
        %s574 = scalar_select %p573, %s43, 1
        %s575 = smul.addr %s574, 2
        %s576 = smul.addr %s575, 4
        %s577 = scalar_lea.vmem %s3, %s576
        %p578 = pneg %p116
        %p579 = pneg %p113
        %p580 = pneg %p137
        %p581 = pneg %p134
        %p582 = pneg %p158
        %p583 = pneg %p155
        %p584 = pneg %p179
        %p585 = pneg %p176
        %p586 = pneg %p200
        %p587 = pneg %p197
        %p588 = pneg %p221
        %p589 = pneg %p218
        %p590 = pneg %p242
        %p591 = pneg %p239
        %p592 = pneg %p263
        %p593 = pneg %p260
        %p594 = pneg %p284
        %p595 = pneg %p281
        %p596 = pneg %p305
        %p597 = pneg %p302
        %p598 = pneg %p326
        %p599 = pneg %p323
        %p600 = pneg %p352
        %p601 = pneg %p349
        %s602 = sand.u32 %s339, 1
        %s603 = scalar_lea.sflag [#allocation6], %s602
        %s604 = sand.u32 %s339, 1
        %s605 = smul.addr %s604, 8
        %s606 = scalar_lea.vmem [#allocation18], %s605
        %p607 = scmp.lt.s32.totalorder %s43, 1
        %s608 = scalar_select %p607, %s43, 1
        %s609 = smul.addr %s608, 8
        %s610 = scalar_lea.vmem %s1, %s609
        %p611 = scmp.lt.s32.totalorder %s43, 1
        %s612 = scalar_select %p611, %s43, 1
        %s613 = smul.addr %s612, 2
        %s614 = smul.addr %s613, 4
        %s615 = scalar_lea.vmem %s3, %s614
        %v617 = vlaneseq
        %v618 = vshrl.u32 %v617, 7
        %v619 = vld [vmem:[%s519] sm:$0x3]
        %v620 = vld [vmem:[%s7] sm:$0xf]
        %v621 = vld [vmem:[%s7 + $0x4] sm:$0x1]
        %v622 = vld [vmem:[%s615] sm:$0xf]
        %v623 = vperm.slane %v619, 0
        %vm624 = vcmp.eq.s32.totalorder %v618, %v623
        %v625 = vsel %vm624, 1, 0
        %v626 = vcvt.s32.f32 %v625
        %v627 = vpack.c.bf16 %v626, %v626
        %v630 = vunpack.c.l.b16 %v620
        %v631 = vunpack.c.l.b16 %v621
        %v632 = vpack.c.b16 %v631, %v630
        %vm633 = vcmask 72704
        %v635 = vsel %vm633, %v622, 0
        %vm637 = vcmask 1043456
        %vm638 = vcmask 1044480
        %v639 = vsel %vm637, 4294967295, 65535
        %v640 = vsel %vm638, %v639, 0
        %v642 = vand.u32 %v632, %v640
        %644 = vmatpush.bf16.msra.mxu0 0
        %645 = vmatpush.bf16.msra.mxu0 0
        %646 = vmatpush.bf16.msra.mxu0 0
        %647 = vmatpush.bf16.msra.mxu0 0
        %648 = vmatpush.bf16.msra.mxu0 0
        %649 = vmatpush.bf16.msra.mxu0 0
        %650 = vmatpush.bf16.msra.mxu0 0
        %651 = vmatpush.bf16.msra.mxu0 %v642
        %652 = vmatmul.bf16.gmra.mxu0 %v635
        %v653 = vpop.f32.mrf.mxu0
        %v654 = vadd.f32 0.0, %v653
        %v655 = vpop.f32.mrf.mxu0
        %656 = vdwg.mxu0
        %s657 = scalar_lea.vmem %s615, 4
        %v658 = vld [vmem:[%s657] sm:$0xf]
        %v659 = vperm.slane %v619, 1
        %vm660 = vcmp.eq.s32.totalorder %v618, %v659
        %v661 = vsel %vm660, 1, 0
        %v662 = vcvt.s32.f32 %v661
        %v663 = vpack.c.bf16 %v662, %v662
        %vm664 = vcmask 64512
        %v666 = vsel %vm664, %v663, 0
        %v669 = vsel %vm637, %v658, 0
        %671 = vmatpush.bf16.msra.mxu0 0
        %672 = vmatpush.bf16.msra.mxu0 0
        %673 = vmatpush.bf16.msra.mxu0 0
        %674 = vmatpush.bf16.msra.mxu0 0
        %675 = vmatpush.bf16.msra.mxu0 0
        %676 = vmatpush.bf16.msra.mxu0 0
        %677 = vmatpush.bf16.msra.mxu0 0
        %678 = vmatpush.bf16.msra.mxu0 %v669
        %679 = vmatmul.bf16.gmra.mxu0 %v666
        %v680 = vpop.f32.mrf.mxu0
        %v681 = vadd.f32 0.0, %v680
        %v682 = vpop.f32.mrf.mxu0
        %683 = vdwg.mxu0
        %v685 = vsel %vm664, %v627, 0
        %v687 = vsel %vm637, %v622, 0
        %689 = vmatpush.bf16.msra.mxu0 0
        %690 = vmatpush.bf16.msra.mxu0 0
        %691 = vmatpush.bf16.msra.mxu0 0
        %692 = vmatpush.bf16.msra.mxu0 0
        %693 = vmatpush.bf16.msra.mxu0 0
        %694 = vmatpush.bf16.msra.mxu0 0
        %695 = vmatpush.bf16.msra.mxu0 0
        %696 = vmatpush.bf16.msra.mxu0 %v687
        %697 = vmatmul.bf16.gmra.mxu0 %v685
        %v698 = vpop.f32.mrf.mxu0
        %v699 = vadd.f32 %v681, %v698
        %v700 = vpop.f32.mrf.mxu0
        %701 = vdwg.mxu0
        %v702 = vsel %vm633, %v658, 0
        %704 = vmatpush.bf16.msra.mxu0 0
        %705 = vmatpush.bf16.msra.mxu0 0
        %706 = vmatpush.bf16.msra.mxu0 0
        %707 = vmatpush.bf16.msra.mxu0 0
        %708 = vmatpush.bf16.msra.mxu0 0
        %709 = vmatpush.bf16.msra.mxu0 0
        %710 = vmatpush.bf16.msra.mxu0 0
        %711 = vmatpush.bf16.msra.mxu0 %v642
        %712 = vmatmul.bf16.gmra.mxu0 %v702
        %v713 = vpop.f32.mrf.mxu0
        %v714 = vadd.f32 0.0, %v713
        %v715 = vpop.f32.mrf.mxu0
        %716 = vdwg.mxu0
        %v717 = vmax.f32 %v654, %v714
        %v718 = vld [vmem:[%s8] sm:$0x1]
        %v720 = vperm.slane %v718, 0
        %v722 = vadd.f32 %v717, %v720
        %v723 = vmax.f32 %v699, 1.0
        %725 = vset.pattern.permute.xlu0 8
        %726 = vperm.xlu0 %725, %v723
        %v727 = vpop.permute.xlu0 %726
        %v729 = vrcp.pop %v727
        %v730 = vmul.f32 %v727, %v729
        %v731 = vsub.f32 1.0, %v730
        %v732 = vmul.f32 %v729, %v731
        %v733 = vadd.f32 %v729, %v732
        %vm734 = vweird.f32 %v727
        %vm735 = vweird.f32 %v729
        %vm736 = vmor %vm734, %vm735
        %v737 = vsel %vm736, %v729, %v733
        %v738 = vand.u32 2147483647, %v727
        %vm739 = vcmp.eq.f32.partialorder %v738, 8.507059e+37
        %v740 = vand.u32 %v727, 2147483648
        %v741 = vor.u32 1.1754944e-38, %v740
        %v742 = vsel %vm739, %v741, %v737
        %v743 = vmul.f32 %v699, %v742
        %v744 = vlaneseq
        %v745 = vand.u32 %v744, 127
        %v746 = vld [vmem:[%s610] sm:$0xff]
        %747 = vset.pattern.permute.xlu0 0
        %748 = vperm.xlu0 %747, %v746
        %v749 = vpop.permute.xlu0 %748
        %vm750 = vcmp.eq.s32.totalorder %v745, %v749
        %v751 = vsel %vm750, 1, 0
        %v752 = vcvt.s32.f32 %v751
        %v753 = vpack.c.bf16 %v752, %v752
        %v754 = vld [vmem:[#allocation7] sm:$0xf]
        %v755 = vld [vmem:[#allocation7 + $0x4] sm:$0x1]
        %v756 = vpack.c.bf16 %v743, %v743
        %v757 = vld [vmem:[#allocation9] sm:$0xf]
        %v759 = vsel %vm664, %v756, 0
        %v762 = vsel %vm637, %v757, 0
        %764 = vmatpush.bf16.msra.mxu0 0
        %765 = vmatpush.bf16.msra.mxu0 0
        %766 = vmatpush.bf16.msra.mxu0 0
        %767 = vmatpush.bf16.msra.mxu0 0
        %768 = vmatpush.bf16.msra.mxu0 0
        %769 = vmatpush.bf16.msra.mxu0 0
        %770 = vmatpush.bf16.msra.mxu0 0
        %771 = vmatpush.bf16.msra.mxu0 %v762
        %772 = vmatmul.bf16.gmra.mxu0 %v759
        %v773 = vpop.f32.mrf.mxu0
        %v774 = vadd.f32 0.0, %v773
        %v775 = vpop.f32.mrf.mxu0
        %776 = vdwg.mxu0
        %v779 = vunpack.c.l.b16 %v754
        %v780 = vunpack.c.l.b16 %v755
        %v781 = vpack.c.b16 %v780, %v779
        %vm782 = vcmask 80896
        %v784 = vsel %vm782, %v753, 0
        %v787 = vsel %vm638, %v781, 0
        %789 = vmatpush.bf16.msra.mxu0 0
        %790 = vmatpush.bf16.msra.mxu0 0
        %791 = vmatpush.bf16.msra.mxu0 0
        %792 = vmatpush.bf16.msra.mxu0 0
        %793 = vmatpush.bf16.msra.mxu0 0
        %794 = vmatpush.bf16.msra.mxu0 0
        %795 = vmatpush.bf16.msra.mxu0 0
        %796 = vmatpush.bf16.msra.mxu0 %v787
        %797 = vmatmul.bf16.gmra.mxu0 %v784
        %v798 = vpop.f32.mrf.mxu0
        %v799 = vadd.f32 %v774, %v798
        %v800 = vpop.f32.mrf.mxu0
        %801 = vdwg.mxu0
        %v802 = vld [vmem:[#allocation10] sm:$0x1]
        %v804 = vperm.slane %v802, 0
        %v806 = vadd.f32 %v799, %v804
        %v807 = vpack.c.bf16 %v806, %v806
        %v808 = vld [vmem:[#allocation12] sm:$0xf]
        %v809 = vld [vmem:[#allocation12 + $0x4] sm:$0xf]
        %v810 = vld [vmem:[#allocation12 + $0x8] sm:$0xf]
        %v811 = vld [vmem:[#allocation12 + $0xc] sm:$0xf]
        %v816 = vunpack.c.l.b16 %v808
        %v817 = vunpack.c.l.b16 %v809
        %v818 = vunpack.c.l.b16 %v810
        %v819 = vunpack.c.l.b16 %v811
        %v820 = vpack.c.b16 %v817, %v816
        %v821 = vpack.c.b16 %v819, %v818
        %vm824 = vcmask 261120
        %v826 = vsel %vm824, %v807, 0
        %828 = vmatpush.bf16.msra.mxu0 0
        %829 = vmatpush.bf16.msra.mxu0 0
        %830 = vmatpush.bf16.msra.mxu0 0
        %831 = vmatpush.bf16.msra.mxu0 0
        %832 = vmatpush.bf16.msra.mxu0 0
        %833 = vmatpush.bf16.msra.mxu0 0
        %834 = vmatpush.bf16.msra.mxu0 %v821
        %835 = vmatpush.bf16.msra.mxu0 %v820
        %836 = vmatmul.bf16.gmra.mxu0 %v826
        %v837 = vpop.f32.mrf.mxu0
        %v838 = vadd.f32 0.0, %v837
        %v839 = vpop.f32.mrf.mxu0
        %840 = vdwg.mxu0
        %v841 = vpack.c.bf16 %v838, %v838
        %v842 = vpack.c.bf16 %v722, %v722
        %v844 = vsel %vm824, %v841, 0
        %v847 = vsel %vm824, %v842, 0
        %849 = vmatpush.bf16.xpose.msra.mxu0 0
        %850 = vmatpush.bf16.xpose.msra.mxu0 0
        %851 = vmatpush.bf16.xpose.msra.mxu0 0
        %852 = vmatpush.bf16.xpose.msra.mxu0 0
        %853 = vmatpush.bf16.xpose.msra.mxu0 0
        %854 = vmatpush.bf16.xpose.msra.mxu0 0
        %855 = vmatpush.bf16.xpose.msra.mxu0 0
        %856 = vmatpush.bf16.xpose.msra.mxu0 %v847
        %857 = vmatmul.bf16.gmra.mxu0 %v844
        %v858 = vpop.f32.mrf.mxu0
        %v859 = vadd.f32 0.0, %v858
        %v860 = vpop.f32.mrf.mxu0
        %861 = vdwg.mxu0
        %s862 = smul.u32 %s43, 128
        %s863 = sld [smem:[#allocation3 + %s862]]
        %s864 = sadd.s32 %s862, 1
        %s865 = sld [smem:[#allocation3 + %s864]]
        %vm866 = vcmp.ge.s32.totalorder %v618, 0
        %vm867 = vcmp.lt.s32.totalorder %v618, 8
        %vm868 = vmand %vm866, %vm867
        %vm869 = vcmp.ge.s32.totalorder %v745, 0
        %v870 = vstv %s865
        %vm871 = vcmp.lt.s32.totalorder %v745, %v870
        %vm872 = vmand %vm869, %vm871
        %v873 = vsel %vm868, 1, 0
        %vm874 = vcmp.eq.s32.totalorder %v873, 1
        %v875 = vsel %vm872, 1, 0
        %vm876 = vcmp.eq.s32.totalorder %v875, 1
        %vm877 = vmand %vm874, %vm876
        %v878 = vstv %s863
        %vm879 = vcmp.lt.s32.totalorder %v618, %v878
        %vm880 = vmand %vm866, %vm879
        %v881 = vsel %vm877, %v859, -1e+09
        %v882 = vsel %vm664, %v881, -inf
        %883 = vmax.xlane.f32.xlu0 %v882
        %v884 = vpop.xlane.xlu0 %883
        %v885 = vsub.f32 %v881, %v884
        %v886 = vmul.f32 %v885, 1.442695
        %v887 = vpow.pop %v886
        %v888 = vsel %vm877, 1, 0
        %v889 = vcvt.s32.f32 %v888
        %v890 = vmul.f32 %v887, %v889
        %v891 = vsel %vm664, %v890, 0.0
        %892 = vadd.xlane.f32.xlu0 %v891
        %v893 = vpop.xlane.xlu0 %892
        %v894 = vmax.f32 %v893, 1e-30
        %v895 = vrcp.pop %v894
        %v896 = vmul.f32 %v894, %v895
        %v897 = vsub.f32 1.0, %v896
        %v898 = vmul.f32 %v895, %v897
        %v899 = vadd.f32 %v895, %v898
        %vm900 = vweird.f32 %v894
        %vm901 = vweird.f32 %v895
        %vm902 = vmor %vm900, %vm901
        %v903 = vsel %vm902, %v895, %v899
        %v904 = vand.u32 2147483647, %v894
        %vm905 = vcmp.eq.f32.partialorder %v904, 8.507059e+37
        %v906 = vand.u32 %v894, 2147483648
        %v907 = vor.u32 1.1754944e-38, %v906
        %v908 = vsel %vm905, %v907, %v903
        %v909 = vmul.f32 %v890, %v908
        %v910 = vld [vmem:[#allocation13] sm:$0xf]
        %v911 = vld [vmem:[#allocation13 + $0x4] sm:$0xf]
        %v912 = vld [vmem:[#allocation13 + $0x8] sm:$0xf]
        %v913 = vld [vmem:[#allocation13 + $0xc] sm:$0xf]
        %v918 = vunpack.c.l.b16 %v910
        %v919 = vunpack.c.l.b16 %v911
        %v920 = vunpack.c.l.b16 %v912
        %v921 = vunpack.c.l.b16 %v913
        %v922 = vpack.c.b16 %v919, %v918
        %v923 = vpack.c.b16 %v921, %v920
        %926 = vmatpush.bf16.msra.mxu0 0
        %927 = vmatpush.bf16.msra.mxu0 0
        %928 = vmatpush.bf16.msra.mxu0 0
        %929 = vmatpush.bf16.msra.mxu0 0
        %930 = vmatpush.bf16.msra.mxu0 0
        %931 = vmatpush.bf16.msra.mxu0 0
        %932 = vmatpush.bf16.msra.mxu0 %v923
        %933 = vmatpush.bf16.msra.mxu0 %v922
        %934 = vmatmul.bf16.gmra.mxu0 %v847
        %v935 = vpop.f32.mrf.mxu0
        %v936 = vadd.f32 0.0, %v935
        %v937 = vpop.f32.mrf.mxu0
        %938 = vdwg.mxu0
        %v939 = vpack.c.bf16 %v909, %v909
        %v940 = vpack.c.bf16 %v936, %v936
        %v942 = vsel %vm664, %v939, 0
        %v945 = vsel %vm637, %v940, 0
        %947 = vmatpush.bf16.msra.mxu0 0
        %948 = vmatpush.bf16.msra.mxu0 0
        %949 = vmatpush.bf16.msra.mxu0 0
        %950 = vmatpush.bf16.msra.mxu0 0
        %951 = vmatpush.bf16.msra.mxu0 0
        %952 = vmatpush.bf16.msra.mxu0 0
        %953 = vmatpush.bf16.msra.mxu0 0
        %954 = vmatpush.bf16.msra.mxu0 %v945
        %955 = vmatmul.bf16.gmra.mxu0 %v942
        %v956 = vpop.f32.mrf.mxu0
        %v957 = vadd.f32 0.0, %v956
        %v958 = vpop.f32.mrf.mxu0
        %959 = vdwg.mxu0
        %v960 = vpack.c.bf16 %v957, %v957
        %v961 = vld [vmem:[#allocation15] sm:$0xf]
        %v962 = vld [vmem:[#allocation15 + $0x4] sm:$0xf]
        %v963 = vld [vmem:[#allocation15 + $0x8] sm:$0xf]
        %v964 = vld [vmem:[#allocation15 + $0xc] sm:$0xf]
        %v969 = vunpack.c.l.b16 %v961
        %v970 = vunpack.c.l.b16 %v962
        %v971 = vunpack.c.l.b16 %v963
        %v972 = vunpack.c.l.b16 %v964
        %v973 = vpack.c.b16 %v970, %v969
        %v974 = vpack.c.b16 %v972, %v971
        %v978 = vsel %vm824, %v960, 0
        %980 = vmatpush.bf16.msra.mxu0 0
        %981 = vmatpush.bf16.msra.mxu0 0
        %982 = vmatpush.bf16.msra.mxu0 0
        %983 = vmatpush.bf16.msra.mxu0 0
        %984 = vmatpush.bf16.msra.mxu0 0
        %985 = vmatpush.bf16.msra.mxu0 0
        %986 = vmatpush.bf16.msra.mxu0 %v974
        %987 = vmatpush.bf16.msra.mxu0 %v973
        %988 = vmatmul.bf16.gmra.mxu0 %v978
        %v989 = vpop.f32.mrf.mxu0
        %v990 = vadd.f32 0.0, %v989
        %v991 = vpop.f32.mrf.mxu0
        %992 = vdwg.mxu0
        %v993 = vadd.f32 %v806, %v990
        %v994 = vsel %vm880, 1, 0
        %vm995 = vcmp.eq.s32.totalorder %v994, 1
        %v996 = vsel %vm995, %v993, 0.0
        %v997 = vpack.c.bf16 %v996, %v996
        %v998 = vld [vmem:[#allocation16] sm:$0xf]
        %v999 = vld [vmem:[#allocation16 + $0x4] sm:$0xf]
        %v1000 = vld [vmem:[#allocation16 + $0x8] sm:$0xf]
        %v1001 = vld [vmem:[#allocation16 + $0xc] sm:$0xf]
        %v1002 = vld [vmem:[%s13] sm:$0x1]
        %v1004 = vperm.slane %v1002, 0
        %v1010 = vunpack.c.l.b16 %v998
        %v1011 = vunpack.c.l.b16 %v999
        %v1012 = vunpack.c.l.b16 %v1000
        %v1013 = vunpack.c.l.b16 %v1001
        %v1014 = vpack.c.b16 %v1011, %v1010
        %v1015 = vpack.c.b16 %v1013, %v1012
        %v1019 = vsel %vm824, %v997, 0
        %1021 = vmatpush.bf16.msra.mxu0 0
        %1022 = vmatpush.bf16.msra.mxu0 0
        %1023 = vmatpush.bf16.msra.mxu0 0
        %1024 = vmatpush.bf16.msra.mxu0 0
        %1025 = vmatpush.bf16.msra.mxu0 0
        %1026 = vmatpush.bf16.msra.mxu0 0
        %1027 = vmatpush.bf16.msra.mxu0 %v1015
        %1028 = vmatpush.bf16.msra.mxu0 %v1014
        %1029 = vmatmul.bf16.gmra.mxu0 %v1019
        %v1030 = vpop.f32.mrf.mxu0
        %v1031 = vadd.f32 %v1004, %v1030
        %v1032 = vpop.f32.mrf.mxu0
        %1033 = vdwg.mxu0
        %1034 = vst [vmem:[%s606] sm:$0xff] %v1031
        %s1035 = sand.u32 %s339, 1
        %s1036 = scalar_lea.sflag [#allocation6], %s1035
        %s1037 = sand.u32 %s339, 1
        %s1038 = smul.addr %s1037, 8
        %s1039 = scalar_lea.vmem [#allocation18], %s1038
        // Predicated region
        $region105: #{fused_predictor_call.1} parent=71 // pred_check
          %p1040 = pneg %p349
        $region106: #{fused_predictor_call.1} parent=71 // pred_check_branch
          %1042 = sbr.rel (%p1040) target = $region108
        $region107: #{fused_predictor_call.1} parent=71 // pred_region
          %1044 = vsyncadd %s1036, 0
          %s1045 = smul.addr %s43, 8
          %s1046 = scalar_lea.hbm %s14, %s1045
          %s1048 = sshll.u32 %s1039, 4
          %s1049 = int_to_ptr.vmem [resolvable:$true] %s1048
          %s1050 = sshll.u32 %s1046, 4
          %s1051 = int_to_ptr.hbm [resolvable:$true] %s1050
          %1053 = dma.vmem_to_hbm [thread:$0]  %s1049, 128, %s1051, %s1036
        $region108: #{fused_predictor_call.1} parent=71 // pred_fallthru
          _
      $region72: #{fused_predictor_call.1} parent=5 // pred_fallthru
        _
      %p1054 = scmp.le.s32.totalorder 2, %s38
      // Predicated region
      $region109: #{fused_predictor_call.1} parent=5 // pred_check
        %p1055 = pneg %p1054
      $region110: #{fused_predictor_call.1} parent=5 // pred_check_branch
        %1057 = sbr.rel (%p1055) target = $region112
      $region111: #{fused_predictor_call.1} parent=5 // pred_region
        %s1058 = ssub.s32 %s38, 2
        // Predicated region
        $region113: #{fused_predictor_call.1} parent=111 // pred_check
          %p1059 = pneg %p355
        $region114: #{fused_predictor_call.1} parent=111 // pred_check_branch
          %1061 = sbr.rel (%p1059) target = $region116
        $region115: #{fused_predictor_call.1} parent=111 // pred_region
          %s1062 = sand.u32 %s340, 1
          %s1063 = scalar_lea.sflag [#allocation6], %s1062
          %s1064 = sand.u32 %s340, 1
          %s1065 = smul.addr %s1064, 8
          %s1066 = scalar_lea.vmem [#allocation18], %s1065
          %1068 = dma.done %s1063, 128
        $region116: #{fused_predictor_call.1} parent=111 // pred_fallthru
          _
      $region112: #{fused_predictor_call.1} parent=5 // pred_fallthru
        _
    $region6: #{fused_predictor_call.1} parent=1 // loop_footer
      %s42 = sadd.s32 1, %s38
    $region7: #{fused_predictor_call.1} parent=1 // loop_footer_branch
      %37 = sbr.rel target = $region3
    $region8: #{fused_predictor_call.1} parent=1 // loop_exit
      _
    %1069 = vsyncpa [#allocation5], 1
    %s1070 = scalar_lea.sflag [#allocation5], 1
    %1071 = vsyncpa %s1070, 1
    %1072 = vsyncpa [#allocation8], 1
    %1073 = vsyncpa [#allocation11], 1
    %1074 = vsyncpa [#allocation14], 1
    %1075 = vsyncpa [#allocation17], 1
    %1076 = vsyncpa [#allocation6], 1
    %s1077 = scalar_lea.sflag [#allocation6], 1
    %1078 = vsyncpa %s1077, 1

</llo_original>
